<compile_context>
chip_gen: v7x
topology: tpu7x:2x2x1
jax: 0.10.0
libtpu: 0.0.40
codegen_flags: <defaults>
</compile_context>

<pallas_src>
import functools

import jax
import jax.numpy as jnp
from jax.experimental import pallas as pl
from jax.experimental.pallas import tpu as pltpu


# ----------------------------- config ---------------------------------------
PRE_NMS_THRESH = 0.3
PRE_NMS_TOP_N = 16
NMS_THRESH = 0.5            # used only by the (untranslated) NMS stage
FPN_POST_NMS_TOP_N = 32     # used only by the (untranslated) NMS stage
MIN_SIZE = 0.1
NUM_CLASSES = 3             # => C = NUM_CLASSES - 1 = 2 class channels
USE_OBB = False             # axis-aligned 6-dof boxes

_LANE = 128
_MIN_SUB = 16                      # min sublane rows per level (bf16-safe tiling)
_MIN_PAD = _MIN_SUB * _LANE        # each level padded to a multiple of 2048 locs


# ----------------------------- Pallas kernel ---------------------------------
def _postproc_kernel(gs_ref, cls_ref, reg_ref, cent_ref, loc_ref, valid_ref,
                     scores_ref, boxes_ref, *, pre_nms_thresh):
    """One (scene, location-tile) block of dense FCOS post-processing.

    Block views:
      gs_ref    : (1, 3, 1, 128)      clip bounds (w, l, h) per scene
      cls_ref   : (1, C, S, 128)      class logits
      reg_ref   : (1, 6, S, 128)      box regression
      cent_ref  : (1, 1, S, 128)      centerness logits
      loc_ref   : (3, S, 128)         location coordinates
      valid_ref : (1, 1, S, 128) bf16 padding/validity mask {0,1}
      scores_ref: (1, C, S, 128) f32  sigmoid(cls)*sigmoid(cent) or -inf
      boxes_ref : (1, 6, S, 128) f32  decoded + clipped boxes
    """
    # --- classification / centerness / candidate threshold (fused) ---
    p = jax.nn.sigmoid(cls_ref[0].astype(jnp.float32))            # (C, S, 128)
    cent = jax.nn.sigmoid(cent_ref[0].astype(jnp.float32))        # (1, S, 128)
    valid = valid_ref[0].astype(jnp.float32) > 0.5                # (1, S, 128)
    cand = (p > jnp.float32(pre_nms_thresh)) & valid              # (C, S, 128)
    # Non-candidates / padded locations get -inf so they can never win top_k.
    scores_ref[0] = jnp.where(cand, p * cent, jnp.float32(-jnp.inf))

    # --- box decode + clip_boxes_to_mesh (vectorized over the 3 axes) ---
    loc = loc_ref[...].astype(jnp.float32)                        # (3, S, 128)
    reg = reg_ref[0].astype(jnp.float32)                          # (6, S, 128)
    hi = gs_ref[0].astype(jnp.float32)                            # (3, 1, 128)
    lo_box = jnp.minimum(jnp.maximum(loc - reg[0:3], 0.0), hi)    # x0, y0, z0
    hi_box = jnp.minimum(jnp.maximum(loc + reg[3:6], 0.0), hi)    # x1, y1, z1
    boxes_ref[0, 0:3, :, :] = lo_box
    boxes_ref[0, 3:6, :, :] = hi_box


def _run_fused_kernel(gs, cls_c, reg_c, cent_c, loc_c, val_c, tile_sub):
    """Single pallas_call over all levels (already concatenated on the
    flattened location axis and reshaped to (..., R, 128))."""
    N, C, R, _ = cls_c.shape
    assert R % tile_sub == 0
    grid = (N, R // tile_sub)

    kernel = functools.partial(_postproc_kernel, pre_nms_thresh=PRE_NMS_THRESH)

    grid_spec = pltpu.PrefetchScalarGridSpec(
        num_scalar_prefetch=0,
        grid=grid,
        in_specs=[
            pl.BlockSpec((1, 3, 1, _LANE), lambda n, t: (n, 0, 0, 0)),         # grid sizes
            pl.BlockSpec((1, C, tile_sub, _LANE), lambda n, t: (n, 0, t, 0)),  # cls logits
            pl.BlockSpec((1, 6, tile_sub, _LANE), lambda n, t: (n, 0, t, 0)),  # box regression
            pl.BlockSpec((1, 1, tile_sub, _LANE), lambda n, t: (n, 0, t, 0)),  # centerness
            pl.BlockSpec((3, tile_sub, _LANE), lambda n, t: (0, t, 0)),        # locations
            pl.BlockSpec((1, 1, tile_sub, _LANE), lambda n, t: (n, 0, t, 0)),  # valid mask (bf16)
        ],
        out_specs=[
            pl.BlockSpec((1, C, tile_sub, _LANE), lambda n, t: (n, 0, t, 0)),  # masked scores
            pl.BlockSpec((1, 6, tile_sub, _LANE), lambda n, t: (n, 0, t, 0)),  # decoded boxes
        ],
    )
    out_shape = (
        jax.ShapeDtypeStruct((N, C, R, _LANE), jnp.float32),
        jax.ShapeDtypeStruct((N, 6, R, _LANE), jnp.float32),
    )
    return pl.pallas_call(
        kernel,
        out_shape=out_shape,
        grid_spec=grid_spec,
        compiler_params=pltpu.CompilerParams(
            dimension_semantics=("parallel", "parallel")),
    )(gs, cls_c, reg_c, cent_c, loc_c, val_c)


# ----------------------------- JAX glue --------------------------------------
def fcos_postprocess(locations, box_cls, box_regression, centerness,
                     grid_sizes, padding_masks):
    """FCOSPostProcessor.forward, dense fixed-capacity formulation.

    Returns (boxes, scores, labels, valid):
      boxes : (N, num_levels*pre_nms_top_n, 7)  [level, x0, y0, z0, x1, y1, z1]
      scores: (N, num_levels*pre_nms_top_n)     sqrt(cls*centerness)
      labels: (N, num_levels*pre_nms_top_n)     class id (1-based), 0 if invalid
      valid : (N, num_levels*pre_nms_top_n)     bool mask of real detections
    """
    num_levels = len(box_cls)
    N, C = box_cls[0].shape[0], box_cls[0].shape[1]

    # --- fuse all levels onto one padded, flattened location axis (single
    # concat pass per tensor kind; tail padding is neutralized by the valid
    # mask inside the kernel). Location ordering matches the torch
    # permute(0,2,3,4,1).reshape(N,-1,C) ordering.
    cls_parts, reg_parts, cent_parts, loc_parts, val_parts = [], [], [], [], []
    level_lp = []
    for lvl in range(num_levels):
        bc, br, ct = box_cls[lvl], box_regression[lvl], centerness[lvl]
        _, _, W, H, D = bc.shape
        L = W * H * D
        Lp = ((L + _MIN_PAD - 1) // _MIN_PAD) * _MIN_PAD
        pad = Lp - L
        level_lp.append(Lp)

        cls_parts.append(bc.reshape(N, C, L))                     # native dtype
        reg_parts.append(br.reshape(N, 6, L))
        cent_parts.append(ct.reshape(N, 1, L))
        loc_parts.append(jnp.transpose(locations[lvl]).astype(jnp.float32))
        if padding_masks is not None and padding_masks[lvl] is not None:
            val_parts.append(padding_masks[lvl].astype(jnp.bfloat16))
        else:
            val_parts.append(jnp.ones((N, L), jnp.bfloat16))
        if pad:
            cls_parts.append(jnp.zeros((N, C, pad), bc.dtype))
            reg_parts.append(jnp.zeros((N, 6, pad), br.dtype))
            cent_parts.append(jnp.zeros((N, 1, pad), ct.dtype))
            loc_parts.append(jnp.zeros((3, pad), jnp.float32))
            val_parts.append(jnp.zeros((N, pad), jnp.bfloat16))

    Lp_total = sum(level_lp)
    R_total = Lp_total // _LANE
    # largest sublane tile dividing the total row count (always a mult. of 16)
    tile_sub = max(s for s in (64, 32, 16) if R_total % s == 0)

    cls_c = jnp.concatenate(cls_parts, axis=-1).reshape(N, C, R_total, _LANE)
    reg_c = jnp.concatenate(reg_parts, axis=-1).reshape(N, 6, R_total, _LANE)
    cent_c = jnp.concatenate(cent_parts, axis=-1).reshape(N, 1, R_total, _LANE)
    loc_c = jnp.concatenate(loc_parts, axis=-1).reshape(3, R_total, _LANE)
    val_c = jnp.concatenate(val_parts, axis=-1).reshape(N, 1, R_total, _LANE)
    gs = jnp.broadcast_to(
        grid_sizes.astype(jnp.float32)[:, :, None, None], (N, 3, 1, _LANE))

    scores, boxes = _run_fused_kernel(gs, cls_c, reg_c, cent_c, loc_c, val_c,
                                      tile_sub)
    scores = scores.reshape(N, C, Lp_total)     # channel-major, no transpose
    boxes = boxes.reshape(N, 6, Lp_total)

    # --- per-level fixed-capacity candidate selection (plain JAX glue) ---
    k = PRE_NMS_TOP_N
    dets_all, scores_all, labels_all, valid_all = [], [], [], []
    off = 0
    for level, Lp in enumerate(level_lp):
        s_lvl = jax.lax.slice_in_dim(scores, off, off + Lp, axis=2)  # (N,C,Lp)
        topv, topi = jax.lax.top_k(s_lvl.reshape(N, C * Lp), k)      # (N, k)
        cls_idx = topi // Lp                                         # 0-based
        loc_idx = (topi % Lp) + off                                  # global loc

        sel = jnp.take_along_axis(boxes, loc_idx[:, None, :], axis=2)  # (N,6,k)
        sel = jnp.swapaxes(sel, 1, 2)                                  # (N,k,6)

        # remove_small_boxes, applied only to the k selected boxes
        keep = ((sel[..., 3] - sel[..., 0]) >= MIN_SIZE) \
             & ((sel[..., 4] - sel[..., 1]) >= MIN_SIZE) \
             & ((sel[..., 5] - sel[..., 2]) >= MIN_SIZE)
        valid = jnp.isfinite(topv) & keep

        sel_scores = jnp.where(valid, jnp.sqrt(jnp.maximum(topv, 0.0)), 0.0)
        labels = jnp.where(valid, cls_idx + 1, 0)

        level_col = jnp.full((N, k, 1), float(level), jnp.float32)
        dets_all.append(jnp.concatenate([level_col, sel], axis=-1))   # (N,k,7)
        scores_all.append(sel_scores)
        labels_all.append(labels)
        valid_all.append(valid)
        off += Lp

    boxes_out = jnp.concatenate(dets_all, axis=1)     # (N, levels*k, 7)
    scores_out = jnp.concatenate(scores_all, axis=1)  # (N, levels*k)
    labels_out = jnp.concatenate(labels_all, axis=1)  # (N, levels*k)
    valid_out = jnp.concatenate(valid_all, axis=1)    # (N, levels*k)

    # TODO(synk): select_over_all_levels (greedy 3D NMS + kthvalue cutoff) is
    # data-dependent sequential control flow with no clean Pallas equivalent;
    # the padded candidate set + scores/labels + validity mask are returned.
    return boxes_out, scores_out, labels_out, valid_out


# ----------------------------- demo ------------------------------------------
def _compute_locations(W, H, D, stride):
    ws = (jnp.arange(W, dtype=jnp.float32) + 0.5) * stride
    hs = (jnp.arange(H, dtype=jnp.float32) + 0.5) * stride
    ds = (jnp.arange(D, dtype=jnp.float32) + 0.5) * stride
    gw, gh, gd = jnp.meshgrid(ws, hs, ds, indexing="ij")
    return jnp.stack([gw.ravel(), gh.ravel(), gd.ravel()], axis=-1)   # (L, 3)


if __name__ == "__main__":
    key = jax.random.PRNGKey(0)
    N = 2
    C = NUM_CLASSES - 1
    level_shapes = [(4, 4, 4, 1), (2, 2, 2, 2)]   # (W, H, D, stride) per level

    locations, box_cls, box_reg, centerness, pad_masks = [], [], [], [], []
    for (W, H, D, stride) in level_shapes:
        key, k1, k2, k3, k4 = jax.random.split(key, 5)
        L = W * H * D
        locations.append(_compute_locations(W, H, D, stride))
        box_cls.append(jax.random.normal(k1, (N, C, W, H, D), jnp.float32))
        box_reg.append(jnp.abs(jax.random.normal(k2, (N, 6, W, H, D),
                                                 jnp.float32)) * 1.5 + 0.2)
        centerness.append(jax.random.normal(k3, (N, 1, W, H, D), jnp.float32))
        pad_masks.append(jax.random.uniform(k4, (N, L)) > 0.1)   # mostly valid

    grid_sizes = jnp.array([[4.0, 4.0, 4.0], [4.0, 4.0, 4.0]], jnp.float32)

    run = jax.jit(fcos_postprocess)
    boxes, scores, labels, valid = run(
        locations, box_cls, box_reg, centerness, grid_sizes, pad_masks)
    jax.block_until_ready((boxes, scores, labels, valid))

    num_levels = len(level_shapes)
    assert boxes.shape == (N, PRE_NMS_TOP_N * num_levels, 7)
    assert scores.shape == (N, PRE_NMS_TOP_N * num_levels)
    assert labels.shape == (N, PRE_NMS_TOP_N * num_levels)
    assert valid.shape == (N, PRE_NMS_TOP_N * num_levels)
    print("KERNEL_OK")
</pallas_src>

<mosaic_0001>
module attributes {stable_mosaic.version = 11 : i64} {
  func.func @_postproc_kernel(%arg0: i32, %arg1: i32, %arg2: memref<1x3x1x128xf32, #tpu.memory_space<vmem>>, %arg3: memref<1x2x32x128xf32, #tpu.memory_space<vmem>>, %arg4: memref<1x6x32x128xf32, #tpu.memory_space<vmem>>, %arg5: memref<1x1x32x128xf32, #tpu.memory_space<vmem>>, %arg6: memref<3x32x128xf32, #tpu.memory_space<vmem>>, %arg7: memref<1x1x32x128xbf16, #tpu.memory_space<vmem>>, %arg8: memref<1x2x32x128xf32, #tpu.memory_space<vmem>>, %arg9: memref<1x6x32x128xf32, #tpu.memory_space<vmem>>) attributes {dimension_semantics = [#tpu.dimension_semantics<parallel>, #tpu.dimension_semantics<parallel>], iteration_bounds = array<i64: 2, 1>, scalar_prefetch = 0 : i64, scratch_operands = 0 : i64, tpu.core_type = #tpu.core_type<tc>, window_params = [{transform_indices = @transform_0, window_bounds = array<i64: 1, 3, 1, 128>}, {transform_indices = @transform_1, window_bounds = array<i64: 1, 2, 32, 128>}, {transform_indices = @transform_2, window_bounds = array<i64: 1, 6, 32, 128>}, {transform_indices = @transform_3, window_bounds = array<i64: 1, 1, 32, 128>}, {transform_indices = @transform_4, window_bounds = array<i64: 3, 32, 128>}, {transform_indices = @transform_5, window_bounds = array<i64: 1, 1, 32, 128>}, {transform_indices = @transform_6, window_bounds = array<i64: 1, 2, 32, 128>}, {transform_indices = @transform_7, window_bounds = array<i64: 1, 6, 32, 128>}]} {
    %c0 = arith.constant 0 : index
    %c0_0 = arith.constant 0 : index
    %c0_1 = arith.constant 0 : index
    %c0_2 = arith.constant 0 : index
    %0 = vector.load %arg3[%c0, %c0_0, %c0_1, %c0_2] : memref<1x2x32x128xf32, #tpu.memory_space<vmem>>, vector<1x2x32x128xf32>
    %1 = vector.shape_cast %0 : vector<1x2x32x128xf32> to vector<2x32x128xf32>
    %2 = arith.negf %1 : vector<2x32x128xf32>
    %3 = math.exp %2 : vector<2x32x128xf32>
    %cst = arith.constant 1.000000e+00 : f32
    %4 = vector.broadcast %cst : f32 to vector<2x32x128xf32>
    %5 = arith.addf %4, %3 : vector<2x32x128xf32>
    %6 = arith.divf %4, %5 : vector<2x32x128xf32>
    %c0_3 = arith.constant 0 : index
    %c0_4 = arith.constant 0 : index
    %c0_5 = arith.constant 0 : index
    %c0_6 = arith.constant 0 : index
    %7 = vector.load %arg5[%c0_3, %c0_4, %c0_5, %c0_6] : memref<1x1x32x128xf32, #tpu.memory_space<vmem>>, vector<1x1x32x128xf32>
    %8 = vector.shape_cast %7 : vector<1x1x32x128xf32> to vector<1x32x128xf32>
    %9 = arith.negf %8 : vector<1x32x128xf32>
    %10 = math.exp %9 : vector<1x32x128xf32>
    %cst_7 = arith.constant 1.000000e+00 : f32
    %11 = vector.broadcast %cst_7 : f32 to vector<1x32x128xf32>
    %12 = arith.addf %11, %10 : vector<1x32x128xf32>
    %13 = arith.divf %11, %12 : vector<1x32x128xf32>
    %c0_8 = arith.constant 0 : index
    %c0_9 = arith.constant 0 : index
    %c0_10 = arith.constant 0 : index
    %c0_11 = arith.constant 0 : index
    %14 = vector.load %arg7[%c0_8, %c0_9, %c0_10, %c0_11] : memref<1x1x32x128xbf16, #tpu.memory_space<vmem>>, vector<1x1x32x128xbf16>
    %15 = vector.shape_cast %14 : vector<1x1x32x128xbf16> to vector<1x32x128xbf16>
    %16 = arith.extf %15 : vector<1x32x128xbf16> to vector<1x32x128xf32>
    %cst_12 = arith.constant 5.000000e-01 : f32
    %17 = vector.broadcast %cst_12 : f32 to vector<1x32x128xf32>
    %18 = arith.cmpf ogt, %16, %17 : vector<1x32x128xf32>
    %cst_13 = arith.constant 3.000000e-01 : f32
    %19 = vector.broadcast %cst_13 : f32 to vector<2x32x128xf32>
    %20 = arith.cmpf ogt, %6, %19 : vector<2x32x128xf32>
    %21 = vector.broadcast %18 : vector<1x32x128xi1> to vector<2x32x128xi1>
    %22 = arith.andi %20, %21 : vector<2x32x128xi1>
    %23 = vector.broadcast %13 : vector<1x32x128xf32> to vector<2x32x128xf32>
    %24 = arith.mulf %6, %23 : vector<2x32x128xf32>
    %cst_14 = arith.constant 0xFF800000 : f32
    %25 = vector.broadcast %cst_14 : f32 to vector<2x32x128xf32>
    %26 = arith.select %22, %24, %25 : vector<2x32x128xi1>, vector<2x32x128xf32>
    %c0_15 = arith.constant 0 : index
    %c0_16 = arith.constant 0 : index
    %c0_17 = arith.constant 0 : index
    %c0_18 = arith.constant 0 : index
    %27 = vector.load %arg8[%c0_15, %c0_16, %c0_17, %c0_18] : memref<1x2x32x128xf32, #tpu.memory_space<vmem>>, vector<1x2x32x128xf32>
    %28 = vector.shape_cast %27 : vector<1x2x32x128xf32> to vector<2x32x128xf32>
    %29 = vector.shape_cast %26 : vector<2x32x128xf32> to vector<1x2x32x128xf32>
    tpu.vector_store %arg8[%c0_15, %c0_16, %c0_17, %c0_18], %29 {strides = array<i32>} : memref<1x2x32x128xf32, #tpu.memory_space<vmem>>, vector<1x2x32x128xf32>,
    %c0_19 = arith.constant 0 : index
    %c0_20 = arith.constant 0 : index
    %c0_21 = arith.constant 0 : index
    %30 = vector.load %arg6[%c0_19, %c0_20, %c0_21] : memref<3x32x128xf32, #tpu.memory_space<vmem>>, vector<3x32x128xf32>
    %c0_22 = arith.constant 0 : index
    %c0_23 = arith.constant 0 : index
    %c0_24 = arith.constant 0 : index
    %c0_25 = arith.constant 0 : index
    %31 = vector.load %arg4[%c0_22, %c0_23, %c0_24, %c0_25] : memref<1x6x32x128xf32, #tpu.memory_space<vmem>>, vector<1x6x32x128xf32>
    %32 = vector.shape_cast %31 : vector<1x6x32x128xf32> to vector<6x32x128xf32>
    %c0_26 = arith.constant 0 : index
    %c0_27 = arith.constant 0 : index
    %c0_28 = arith.constant 0 : index
    %c0_29 = arith.constant 0 : index
    %33 = vector.load %arg2[%c0_26, %c0_27, %c0_28, %c0_29] : memref<1x3x1x128xf32, #tpu.memory_space<vmem>>, vector<1x3x1x128xf32>
    %34 = vector.shape_cast %33 : vector<1x3x1x128xf32> to vector<3x1x128xf32>
    %35 = vector.extract_strided_slice %32 {offsets = [0, 0, 0], sizes = [3, 32, 128], strides = [1, 1, 1]} : vector<6x32x128xf32> to vector<3x32x128xf32>
    %36 = arith.subf %30, %35 : vector<3x32x128xf32>
    %cst_30 = arith.constant 0.000000e+00 : f32
    %37 = vector.broadcast %cst_30 : f32 to vector<3x32x128xf32>
    %38 = arith.maximumf %36, %37 : vector<3x32x128xf32>
    %39 = vector.broadcast %34 : vector<3x1x128xf32> to vector<3x32x128xf32>
    %40 = arith.minimumf %38, %39 : vector<3x32x128xf32>
    %41 = vector.extract_strided_slice %32 {offsets = [3, 0, 0], sizes = [3, 32, 128], strides = [1, 1, 1]} : vector<6x32x128xf32> to vector<3x32x128xf32>
    %42 = arith.addf %30, %41 : vector<3x32x128xf32>
    %cst_31 = arith.constant 0.000000e+00 : f32
    %43 = vector.broadcast %cst_31 : f32 to vector<3x32x128xf32>
    %44 = arith.maximumf %42, %43 : vector<3x32x128xf32>
    %45 = vector.broadcast %34 : vector<3x1x128xf32> to vector<3x32x128xf32>
    %46 = arith.minimumf %44, %45 : vector<3x32x128xf32>
    %c0_32 = arith.constant 0 : index
    %c0_33 = arith.constant 0 : index
    %c0_34 = arith.constant 0 : index
    %c0_35 = arith.constant 0 : index
    %47 = vector.load %arg9[%c0_32, %c0_33, %c0_34, %c0_35] : memref<1x6x32x128xf32, #tpu.memory_space<vmem>>, vector<1x3x32x128xf32>
    %48 = vector.shape_cast %47 : vector<1x3x32x128xf32> to vector<3x32x128xf32>
    %49 = vector.shape_cast %40 : vector<3x32x128xf32> to vector<1x3x32x128xf32>
    tpu.vector_store %arg9[%c0_32, %c0_33, %c0_34, %c0_35], %49 {strides = array<i32>} : memref<1x6x32x128xf32, #tpu.memory_space<vmem>>, vector<1x3x32x128xf32>,
    %c0_36 = arith.constant 0 : index
    %c3 = arith.constant 3 : index
    %c0_37 = arith.constant 0 : index
    %c0_38 = arith.constant 0 : index
    %50 = vector.load %arg9[%c0_36, %c3, %c0_37, %c0_38] : memref<1x6x32x128xf32, #tpu.memory_space<vmem>>, vector<1x3x32x128xf32>
    %51 = vector.shape_cast %50 : vector<1x3x32x128xf32> to vector<3x32x128xf32>
    %52 = vector.shape_cast %46 : vector<3x32x128xf32> to vector<1x3x32x128xf32>
    tpu.vector_store %arg9[%c0_36, %c3, %c0_37, %c0_38], %52 {strides = array<i32>} : memref<1x6x32x128xf32, #tpu.memory_space<vmem>>, vector<1x3x32x128xf32>,
    return
  }
  func.func @transform_0(%arg0: i32, %arg1: i32) -> (i32, i32, i32, i32) {
    %c0_i32 = arith.constant 0 : i32
    %c0_i32_0 = arith.constant 0 : i32
    %c0_i32_1 = arith.constant 0 : i32
    %c0_i32_2 = arith.constant 0 : i32
    return %arg0, %c0_i32, %c0_i32_0, %c0_i32_1 : i32, i32, i32, i32
  }
  func.func @transform_1(%arg0: i32, %arg1: i32) -> (i32, i32, i32, i32) {
    %c0_i32 = arith.constant 0 : i32
    %c0_i32_0 = arith.constant 0 : i32
    %c0_i32_1 = arith.constant 0 : i32
    return %arg0, %c0_i32, %arg1, %c0_i32_0 : i32, i32, i32, i32
  }
  func.func @transform_2(%arg0: i32, %arg1: i32) -> (i32, i32, i32, i32) {
    %c0_i32 = arith.constant 0 : i32
    %c0_i32_0 = arith.constant 0 : i32
    %c0_i32_1 = arith.constant 0 : i32
    return %arg0, %c0_i32, %arg1, %c0_i32_0 : i32, i32, i32, i32
  }
  func.func @transform_3(%arg0: i32, %arg1: i32) -> (i32, i32, i32, i32) {
    %c0_i32 = arith.constant 0 : i32
    %c0_i32_0 = arith.constant 0 : i32
    %c0_i32_1 = arith.constant 0 : i32
    return %arg0, %c0_i32, %arg1, %c0_i32_0 : i32, i32, i32, i32
  }
  func.func @transform_4(%arg0: i32, %arg1: i32) -> (i32, i32, i32) {
    %c0_i32 = arith.constant 0 : i32
    %c0_i32_0 = arith.constant 0 : i32
    %c0_i32_1 = arith.constant 0 : i32
    return %c0_i32, %arg1, %c0_i32_0 : i32, i32, i32
  }
  func.func @transform_5(%arg0: i32, %arg1: i32) -> (i32, i32, i32, i32) {
    %c0_i32 = arith.constant 0 : i32
    %c0_i32_0 = arith.constant 0 : i32
    %c0_i32_1 = arith.constant 0 : i32
    return %arg0, %c0_i32, %arg1, %c0_i32_0 : i32, i32, i32, i32
  }
  func.func @transform_6(%arg0: i32, %arg1: i32) -> (i32, i32, i32, i32) {
    %c0_i32 = arith.constant 0 : i32
    %c0_i32_0 = arith.constant 0 : i32
    %c0_i32_1 = arith.constant 0 : i32
    return %arg0, %c0_i32, %arg1, %c0_i32_0 : i32, i32, i32, i32
  }
  func.func @transform_7(%arg0: i32, %arg1: i32) -> (i32, i32, i32, i32) {
    %c0_i32 = arith.constant 0 : i32
    %c0_i32_0 = arith.constant 0 : i32
    %c0_i32_1 = arith.constant 0 : i32
    return %arg0, %c0_i32, %arg1, %c0_i32_0 : i32, i32, i32, i32
  }
}

</mosaic_0001>

<llo_original>
// kernel: custom-call
$region0: #{custom-call}
  #allocation0 [shape = 'u32[8,128]{1,0}', space=vmem, size = 0x1000, scoped, tag = 'scratch']
  #allocation1 [shape = 'u32[8,128]{1,0}', space=vmem, size = 0x1000, scoped, tag = 'scratch']
  #allocation2 [shape = 'u32[8,128]{1,0}', space=vmem, size = 0x1000, scoped, tag = 'scratch']
  #allocation3 [shape = 'u32[8,128]{1,0}', space=vmem, size = 0x1000, scoped, tag = 'scratch']
  #allocation4 [shape = 'u32[8,128]{1,0}', space=vmem, size = 0x1000, scoped, tag = 'scratch']
  #allocation5 [shape = 'u32[8,128]{1,0}', space=vmem, size = 0x1000, scoped, tag = 'scratch']
  #allocation6 [shape = 'u32[8,128]{1,0}', space=vmem, size = 0x1000, scoped, tag = 'scratch']
  %s0 = inlined_call_operand.vmem [shape: f32[2,4096], index: 0, kind: input, shape index: {}]
  %s1 = inlined_call_operand.vmem [shape: f32[2,16], index: 1, kind: output, shape index: {0}]
  %s2 = inlined_call_operand.vmem [shape: s32[2,16], index: 2, kind: output, shape index: {1}]
  %3 = xla_tuple %s1, %s2
  %4 = xla_tuple 2147483648, 2147483647
  $region1: #{custom-call} parent=0
    #allocation7 [shape = 'u8[4096]{0}', space=vmem, size = 0x1000, scoped, tag = 'operand span for operand 1']
    #allocation8 [shape = 'u8[1024]{0}', space=vmem, size = 0x400, scoped, tag = 'packed  for operand 1']
    #allocation9 [shape = 'u8[4096]{0}', space=vmem, size = 0x1000, scoped, tag = 'operand span for operand 2']
    #allocation10 [shape = 'u8[1024]{0}', space=vmem, size = 0x400, scoped, tag = 'packed  for operand 2']
    #allocation11 [shape = 'f32[16,2]{1,0:T(8,128)}', space=vmem, size = 0x2000, scoped, tag = 'scoped memory for custom-call']
    #allocation12 [shape = 'f32[16,2]{1,0:T(8,128)}', space=vmem, size = 0x2000, scoped, tag = 'scoped memory for custom-call']
    #allocation13 [shape = 's32[16,2]{1,0:T(8,128)}', space=vmem, size = 0x2000, scoped, tag = 'scoped memory for custom-call']
    #allocation14 [shape = 's32[16,2]{1,0:T(8,128)}', space=vmem, size = 0x2000, scoped, tag = 'scoped memory for custom-call']
    %5 = xla_tuple [#allocation7], [#allocation9]
    %6 = vst [vmem:[#allocation11] sm:$0xff] 2147483648
    %s7 = scalar_lea.vmem [#allocation11], 8
    %8 = vst [vmem:[%s7] sm:$0xff] 2147483648
    %9 = vst [vmem:[#allocation13] sm:$0xff] 2147483647
    %s10 = scalar_lea.vmem [#allocation13], 8
    %11 = vst [vmem:[%s10] sm:$0xff] 2147483647
    %12 = xla_tuple [#allocation11], [#allocation13]
    %13 = xla_tuple [#allocation12], [#allocation14]
    $region2: #{custom-call} parent=1
      #allocation15 [shape = 'u8[32768]{0}', space=vmem, size = 0x8000, scoped, tag = 'operand span for operand 0']
      #allocation16 [shape = 's32[8192]{0}', space=vmem, size = 0x8000, scoped, tag = 'scoped memory for custom-call']
      // Predicated region
      $region3: #{custom-call} parent=2 // pred_check
        _
      $region4: #{custom-call} parent=2 // pred_check_branch
        %15 = sbr.rel (0) target = $region6
      $region5: #{custom-call} parent=2 // pred_region
        // Predicated region
        $region7: #{custom-call} parent=5 // pred_check
          _
        $region8: #{custom-call} parent=5 // pred_check_branch
          %17 = sbr.rel (0) target = $region10
        $region9: #{custom-call} parent=5 // pred_region
          // Predicated region
          $region11: #{custom-call} parent=9 // pred_check
            _
          $region12: #{custom-call} parent=9 // pred_check_branch
            %19 = sbr.rel (0) target = $region14
          $region13: #{custom-call} parent=9 // pred_region
            loop: start=0, step=1, limit=1
            $region15: #{custom-call} parent=13 // loop_pre_header
              _
            $region16: #{custom-call} parent=13 // loop_header
              %s21 = sphi 0, %s25
              %p22 = scmp.ge.s32.totalorder %s21, 1
              %s26 = sphi %s0, %s0
              %s27 = sphi [#allocation15], [#allocation15]
            $region17: #{custom-call} parent=13 // loop_header_branch
              %24 = sbr.rel (%p22) target = $region21
            $region18: #{custom-call} parent=13 // loop_body
              %v28 = vld [vmem:[%s26] sm:$0xff]
              %29 = vst [vmem:[%s27] sm:$0xff] %v28
              %v30 = vld [vmem:[%s26 + $0x8] sm:$0xff]
              %31 = vst [vmem:[%s27 + $0x8] sm:$0xff] %v30
              %v32 = vld [vmem:[%s26 + $0x10] sm:$0xff]
              %33 = vst [vmem:[%s27 + $0x10] sm:$0xff] %v32
              %v34 = vld [vmem:[%s26 + $0x18] sm:$0xff]
              %35 = vst [vmem:[%s27 + $0x18] sm:$0xff] %v34
              %v36 = vld [vmem:[%s26 + $0x20] sm:$0xff]
              %37 = vst [vmem:[%s27 + $0x20] sm:$0xff] %v36
              %v38 = vld [vmem:[%s26 + $0x28] sm:$0xff]
              %39 = vst [vmem:[%s27 + $0x28] sm:$0xff] %v38
              %v40 = vld [vmem:[%s26 + $0x30] sm:$0xff]
              %41 = vst [vmem:[%s27 + $0x30] sm:$0xff] %v40
              %v42 = vld [vmem:[%s26 + $0x38] sm:$0xff]
              %43 = vst [vmem:[%s27 + $0x38] sm:$0xff] %v42
            $region19: #{custom-call} parent=13 // loop_footer
              %s25 = sadd.s32 1, %s21
            $region20: #{custom-call} parent=13 // loop_footer_branch
              %20 = sbr.rel target = $region16
            $region21: #{custom-call} parent=13 // loop_exit
              _
          $region14: #{custom-call} parent=9 // pred_fallthru
            _
          // Predicated region
          $region22: #{custom-call} parent=9 // pred_check
            _
          $region23: #{custom-call} parent=9 // pred_check_branch
            %45 = sbr.rel target = $region25
          $region24: #{custom-call} parent=9 // pred_region
            _
          $region25: #{custom-call} parent=9 // pred_fallthru
            _
        $region10: #{custom-call} parent=5 // pred_fallthru
          _
        %46 = vnop
      $region6: #{custom-call} parent=2 // pred_fallthru
        _
      // Predicated region
      $region26: #{custom-call} parent=2 // pred_check
        _
      $region27: #{custom-call} parent=2 // pred_check_branch
        %48 = sbr.rel (0) target = $region29
      $region28: #{custom-call} parent=2 // pred_region
        _
      $region29: #{custom-call} parent=2 // pred_fallthru
        _
      %v49 = vlaneseq
      %v50 = vand.u32 %v49, 127
      %v51 = vlaneseq
      %v52 = vshrl.u32 %v51, 7
      %v53 = vshrl.u32 %v52, 1
      %v54 = vand.u32 %v52, 1
      %v55 = vmul.u32 %v53, 128
      %v56 = vadd.s32 %v50, %v55
      %v58 = vld [vmem:[#allocation15] sm:$0xff]
      %vm59 = vcmp.lt.s32.totalorder %v58, 0
      %v60 = vsub.s32 2147483647, %v58
      %v61 = vsel %vm59, %v60, %v58
      %vm63 = vcmp.lt.s32.totalorder %v56, 4096
      %v64 = vsel %vm63, %v61, 2147483648
      %65 = vst [vmem:[#allocation15] sm:$0xff] %v64
      %s66 = scalar_lea.vmem [#allocation15], 8
      %v67 = vld [vmem:[%s66] sm:$0xff]
      %vm68 = vcmp.lt.s32.totalorder %v67, 0
      %v69 = vsub.s32 2147483647, %v67
      %v70 = vsel %vm68, %v69, %v67
      %v71 = vadd.s32 %v56, 512
      %vm72 = vcmp.lt.s32.totalorder %v71, 4096
      %v73 = vsel %vm72, %v70, 2147483648
      %74 = vst [vmem:[%s66] sm:$0xff] %v73
      %s75 = scalar_lea.vmem [#allocation15], 16
      %v76 = vld [vmem:[%s75] sm:$0xff]
      %vm77 = vcmp.lt.s32.totalorder %v76, 0
      %v78 = vsub.s32 2147483647, %v76
      %v79 = vsel %vm77, %v78, %v76
      %v80 = vadd.s32 %v56, 1024
      %vm81 = vcmp.lt.s32.totalorder %v80, 4096
      %v82 = vsel %vm81, %v79, 2147483648
      %83 = vst [vmem:[%s75] sm:$0xff] %v82
      %s84 = scalar_lea.vmem [#allocation15], 24
      %v85 = vld [vmem:[%s84] sm:$0xff]
      %vm86 = vcmp.lt.s32.totalorder %v85, 0
      %v87 = vsub.s32 2147483647, %v85
      %v88 = vsel %vm86, %v87, %v85
      %v89 = vadd.s32 %v56, 1536
      %vm90 = vcmp.lt.s32.totalorder %v89, 4096
      %v91 = vsel %vm90, %v88, 2147483648
      %92 = vst [vmem:[%s84] sm:$0xff] %v91
      %s93 = scalar_lea.vmem [#allocation15], 32
      %v94 = vld [vmem:[%s93] sm:$0xff]
      %vm95 = vcmp.lt.s32.totalorder %v94, 0
      %v96 = vsub.s32 2147483647, %v94
      %v97 = vsel %vm95, %v96, %v94
      %v98 = vadd.s32 %v56, 2048
      %vm99 = vcmp.lt.s32.totalorder %v98, 4096
      %v100 = vsel %vm99, %v97, 2147483648
      %101 = vst [vmem:[%s93] sm:$0xff] %v100
      %s102 = scalar_lea.vmem [#allocation15], 40
      %v103 = vld [vmem:[%s102] sm:$0xff]
      %vm104 = vcmp.lt.s32.totalorder %v103, 0
      %v105 = vsub.s32 2147483647, %v103
      %v106 = vsel %vm104, %v105, %v103
      %v107 = vadd.s32 %v56, 2560
      %vm108 = vcmp.lt.s32.totalorder %v107, 4096
      %v109 = vsel %vm108, %v106, 2147483648
      %110 = vst [vmem:[%s102] sm:$0xff] %v109
      %s111 = scalar_lea.vmem [#allocation15], 48
      %v112 = vld [vmem:[%s111] sm:$0xff]
      %vm113 = vcmp.lt.s32.totalorder %v112, 0
      %v114 = vsub.s32 2147483647, %v112
      %v115 = vsel %vm113, %v114, %v112
      %v116 = vadd.s32 %v56, 3072
      %vm117 = vcmp.lt.s32.totalorder %v116, 4096
      %v118 = vsel %vm117, %v115, 2147483648
      %119 = vst [vmem:[%s111] sm:$0xff] %v118
      %s120 = scalar_lea.vmem [#allocation15], 56
      %v121 = vld [vmem:[%s120] sm:$0xff]
      %vm122 = vcmp.lt.s32.totalorder %v121, 0
      %v123 = vsub.s32 2147483647, %v121
      %v124 = vsel %vm122, %v123, %v121
      %v125 = vadd.s32 %v56, 3584
      %vm126 = vcmp.lt.s32.totalorder %v125, 4096
      %v127 = vsel %vm126, %v124, 2147483648
      %128 = vst [vmem:[%s120] sm:$0xff] %v127
      %v129 = vlaneseq
      %v130 = vand.u32 %v129, 127
      %v131 = vlaneseq
      %v132 = vshrl.u32 %v131, 7
      %v133 = vshrl.u32 %v132, 1
      %v134 = vand.u32 %v132, 1
      %v135 = vmul.u32 %v133, 128
      %v136 = vadd.s32 %v130, %v135
      %139 = vst [vmem:[#allocation16] sm:$0xff] %v136
      %v140 = vadd.s32 %v136, 512
      %s141 = scalar_lea.vmem [#allocation16], 8
      %142 = vst [vmem:[%s141] sm:$0xff] %v140
      %v143 = vadd.s32 %v136, 1024
      %s144 = scalar_lea.vmem [#allocation16], 16
      %145 = vst [vmem:[%s144] sm:$0xff] %v143
      %v146 = vadd.s32 %v136, 1536
      %s147 = scalar_lea.vmem [#allocation16], 24
      %148 = vst [vmem:[%s147] sm:$0xff] %v146
      %v149 = vadd.s32 %v136, 2048
      %s150 = scalar_lea.vmem [#allocation16], 32
      %151 = vst [vmem:[%s150] sm:$0xff] %v149
      %v152 = vadd.s32 %v136, 2560
      %s153 = scalar_lea.vmem [#allocation16], 40
      %154 = vst [vmem:[%s153] sm:$0xff] %v152
      %v155 = vadd.s32 %v136, 3072
      %s156 = scalar_lea.vmem [#allocation16], 48
      %157 = vst [vmem:[%s156] sm:$0xff] %v155
      %v158 = vadd.s32 %v136, 3584
      %s159 = scalar_lea.vmem [#allocation16], 56
      %160 = vst [vmem:[%s159] sm:$0xff] %v158
      %161 = xla_tuple [#allocation15], [#allocation16]
      %162 = vst [vmem:[#allocation12] sm:$0xff] 2147483648
      %s163 = scalar_lea.vmem [#allocation12], 8
      %164 = vst [vmem:[%s163] sm:$0xff] 2147483648
      %165 = vst [vmem:[#allocation14] sm:$0xff] 2147483647
      %s166 = scalar_lea.vmem [#allocation14], 8
      %167 = vst [vmem:[%s166] sm:$0xff] 2147483647
      %168 = xla_tuple [#allocation12], [#allocation14]
      loop: start=0, step=1, limit=16
      $region30: #{custom-call} parent=2 // loop_pre_header
        _
      $region31: #{custom-call} parent=2 // loop_header
        %s170 = sphi 0, %s174
        %p171 = scmp.ge.s32.totalorder %s170, 16
      $region32: #{custom-call} parent=2 // loop_header_branch
        %173 = sbr.rel (%p171) target = $region36
      $region33: #{custom-call} parent=2 // loop_body
        %v175 = vld [vmem:[#allocation15] sm:$0xff]
        %v176 = vld [vmem:[#allocation16] sm:$0xff]
        %177 = xla_tuple %v175, %v176
        %s178 = scalar_lea.vmem [#allocation15], 8
        %v179 = vld [vmem:[%s178] sm:$0xff]
        %s180 = scalar_lea.vmem [#allocation16], 8
        %v181 = vld [vmem:[%s180] sm:$0xff]
        %182 = xla_tuple %v179, %v181
        %vm183 = vcmp.gt.s32.totalorder %v179, %v175
        %vm184 = vcmp.eq.s32.totalorder %v179, %v175
        %vm185 = vcmp.lt.s32.totalorder %v181, %v176
        %vm186 = vmand %vm184, %vm185
        %vm187 = vmor %vm183, %vm186
        %v188 = vsel %vm187, %v179, %v175
        %v189 = vsel %vm187, %v181, %v176
        %190 = xla_tuple %v188, %v189
        %s191 = scalar_lea.vmem [#allocation15], 16
        %v192 = vld [vmem:[%s191] sm:$0xff]
        %s193 = scalar_lea.vmem [#allocation16], 16
        %v194 = vld [vmem:[%s193] sm:$0xff]
        %195 = xla_tuple %v192, %v194
        %vm196 = vcmp.gt.s32.totalorder %v192, %v188
        %vm197 = vcmp.eq.s32.totalorder %v192, %v188
        %vm198 = vcmp.lt.s32.totalorder %v194, %v189
        %vm199 = vmand %vm197, %vm198
        %vm200 = vmor %vm196, %vm199
        %v201 = vsel %vm200, %v192, %v188
        %v202 = vsel %vm200, %v194, %v189
        %203 = xla_tuple %v201, %v202
        %s204 = scalar_lea.vmem [#allocation15], 24
        %v205 = vld [vmem:[%s204] sm:$0xff]
        %s206 = scalar_lea.vmem [#allocation16], 24
        %v207 = vld [vmem:[%s206] sm:$0xff]
        %208 = xla_tuple %v205, %v207
        %vm209 = vcmp.gt.s32.totalorder %v205, %v201
        %vm210 = vcmp.eq.s32.totalorder %v205, %v201
        %vm211 = vcmp.lt.s32.totalorder %v207, %v202
        %vm212 = vmand %vm210, %vm211
        %vm213 = vmor %vm209, %vm212
        %v214 = vsel %vm213, %v205, %v201
        %v215 = vsel %vm213, %v207, %v202
        %216 = xla_tuple %v214, %v215
        %s217 = scalar_lea.vmem [#allocation15], 32
        %v218 = vld [vmem:[%s217] sm:$0xff]
        %s219 = scalar_lea.vmem [#allocation16], 32
        %v220 = vld [vmem:[%s219] sm:$0xff]
        %221 = xla_tuple %v218, %v220
        %vm222 = vcmp.gt.s32.totalorder %v218, %v214
        %vm223 = vcmp.eq.s32.totalorder %v218, %v214
        %vm224 = vcmp.lt.s32.totalorder %v220, %v215
        %vm225 = vmand %vm223, %vm224
        %vm226 = vmor %vm222, %vm225
        %v227 = vsel %vm226, %v218, %v214
        %v228 = vsel %vm226, %v220, %v215
        %229 = xla_tuple %v227, %v228
        %s230 = scalar_lea.vmem [#allocation15], 40
        %v231 = vld [vmem:[%s230] sm:$0xff]
        %s232 = scalar_lea.vmem [#allocation16], 40
        %v233 = vld [vmem:[%s232] sm:$0xff]
        %234 = xla_tuple %v231, %v233
        %vm235 = vcmp.gt.s32.totalorder %v231, %v227
        %vm236 = vcmp.eq.s32.totalorder %v231, %v227
        %vm237 = vcmp.lt.s32.totalorder %v233, %v228
        %vm238 = vmand %vm236, %vm237
        %vm239 = vmor %vm235, %vm238
        %v240 = vsel %vm239, %v231, %v227
        %v241 = vsel %vm239, %v233, %v228
        %242 = xla_tuple %v240, %v241
        %s243 = scalar_lea.vmem [#allocation15], 48
        %v244 = vld [vmem:[%s243] sm:$0xff]
        %s245 = scalar_lea.vmem [#allocation16], 48
        %v246 = vld [vmem:[%s245] sm:$0xff]
        %247 = xla_tuple %v244, %v246
        %vm248 = vcmp.gt.s32.totalorder %v244, %v240
        %vm249 = vcmp.eq.s32.totalorder %v244, %v240
        %vm250 = vcmp.lt.s32.totalorder %v246, %v241
        %vm251 = vmand %vm249, %vm250
        %vm252 = vmor %vm248, %vm251
        %v253 = vsel %vm252, %v244, %v240
        %v254 = vsel %vm252, %v246, %v241
        %255 = xla_tuple %v253, %v254
        %s256 = scalar_lea.vmem [#allocation15], 56
        %v257 = vld [vmem:[%s256] sm:$0xff]
        %s258 = scalar_lea.vmem [#allocation16], 56
        %v259 = vld [vmem:[%s258] sm:$0xff]
        %260 = xla_tuple %v257, %v259
        %vm261 = vcmp.gt.s32.totalorder %v257, %v253
        %vm262 = vcmp.eq.s32.totalorder %v257, %v253
        %vm263 = vcmp.lt.s32.totalorder %v259, %v254
        %vm264 = vmand %vm262, %vm263
        %vm265 = vmor %vm261, %vm264
        %v266 = vsel %vm265, %v257, %v253
        %v267 = vsel %vm265, %v259, %v254
        %268 = xla_tuple %v266, %v267
        %v269 = vrot.slane %v266, 2
        %v270 = vrot.slane %v267, 2
        %271 = xla_tuple %v269, %v270
        %vm272 = vcmp.gt.s32.totalorder %v269, %v266
        %vm273 = vcmp.eq.s32.totalorder %v269, %v266
        %vm274 = vcmp.lt.s32.totalorder %v270, %v267
        %vm275 = vmand %vm273, %vm274
        %vm276 = vmor %vm272, %vm275
        %v277 = vsel %vm276, %v269, %v266
        %v278 = vsel %vm276, %v270, %v267
        %279 = xla_tuple %v277, %v278
        %v280 = vrot.slane %v277, 2
        %v281 = vrot.slane %v278, 2
        %282 = xla_tuple %v280, %v281
        %vm283 = vcmp.gt.s32.totalorder %v280, %v277
        %vm284 = vcmp.eq.s32.totalorder %v280, %v277
        %vm285 = vcmp.lt.s32.totalorder %v281, %v278
        %vm286 = vmand %vm284, %vm285
        %vm287 = vmor %vm283, %vm286
        %v288 = vsel %vm287, %v280, %v277
        %v289 = vsel %vm287, %v281, %v278
        %290 = xla_tuple %v288, %v289
        %v291 = vrot.slane %v288, 2
        %v292 = vrot.slane %v289, 2
        %293 = xla_tuple %v291, %v292
        %vm294 = vcmp.gt.s32.totalorder %v291, %v288
        %vm295 = vcmp.eq.s32.totalorder %v291, %v288
        %vm296 = vcmp.lt.s32.totalorder %v292, %v289
        %vm297 = vmand %vm295, %vm296
        %vm298 = vmor %vm294, %vm297
        %v299 = vsel %vm298, %v291, %v288
        %v300 = vsel %vm298, %v292, %v289
        %301 = xla_tuple %v299, %v300
        %302 = vxpose.xlu0.b32.start [1/16] %v299, 128
        %303 = vxpose.xlu0.b32.cont [2/16] %v299, 128
        %304 = vxpose.xlu0.b32.cont [3/16] %v299, 128
        %305 = vxpose.xlu0.b32.cont [4/16] %v299, 128
        %306 = vxpose.xlu0.b32.cont [5/16] %v299, 128
        %307 = vxpose.xlu0.b32.cont [6/16] %v299, 128
        %308 = vxpose.xlu0.b32.cont [7/16] %v299, 128
        %309 = vxpose.xlu0.b32.cont [8/16] %v299, 128
        %310 = vxpose.xlu0.b32.cont [9/16] %v299, 128
        %311 = vxpose.xlu0.b32.cont [10/16] %v299, 128
        %312 = vxpose.xlu0.b32.cont [11/16] %v299, 128
        %313 = vxpose.xlu0.b32.cont [12/16] %v299, 128
        %314 = vxpose.xlu0.b32.cont [13/16] %v299, 128
        %315 = vxpose.xlu0.b32.cont [14/16] %v299, 128
        %316 = vxpose.xlu0.b32.cont [15/16] %v299, 128
        %317 = vxpose.xlu0.b32.end [16/16] %v299, 128
        %v318 = vpop.trf.xlu0
        %v319 = vpop.trf.xlu0
        %v320 = vpop.trf.xlu0
        %v321 = vpop.trf.xlu0
        %v322 = vpop.trf.xlu0
        %v323 = vpop.trf.xlu0
        %v324 = vpop.trf.xlu0
        %v325 = vpop.trf.xlu0
        %v326 = vpop.trf.xlu0
        %v327 = vpop.trf.xlu0
        %v328 = vpop.trf.xlu0
        %v329 = vpop.trf.xlu0
        %v330 = vpop.trf.xlu0
        %v331 = vpop.trf.xlu0
        %v332 = vpop.trf.xlu0
        %v333 = vpop.trf.xlu0
        %334 = vxpose.xlu0.b32.start [1/16] %v300, 128
        %335 = vxpose.xlu0.b32.cont [2/16] %v300, 128
        %336 = vxpose.xlu0.b32.cont [3/16] %v300, 128
        %337 = vxpose.xlu0.b32.cont [4/16] %v300, 128
        %338 = vxpose.xlu0.b32.cont [5/16] %v300, 128
        %339 = vxpose.xlu0.b32.cont [6/16] %v300, 128
        %340 = vxpose.xlu0.b32.cont [7/16] %v300, 128
        %341 = vxpose.xlu0.b32.cont [8/16] %v300, 128
        %342 = vxpose.xlu0.b32.cont [9/16] %v300, 128
        %343 = vxpose.xlu0.b32.cont [10/16] %v300, 128
        %344 = vxpose.xlu0.b32.cont [11/16] %v300, 128
        %345 = vxpose.xlu0.b32.cont [12/16] %v300, 128
        %346 = vxpose.xlu0.b32.cont [13/16] %v300, 128
        %347 = vxpose.xlu0.b32.cont [14/16] %v300, 128
        %348 = vxpose.xlu0.b32.cont [15/16] %v300, 128
        %349 = vxpose.xlu0.b32.end [16/16] %v300, 128
        %v350 = vpop.trf.xlu0
        %v351 = vpop.trf.xlu0
        %v352 = vpop.trf.xlu0
        %v353 = vpop.trf.xlu0
        %v354 = vpop.trf.xlu0
        %v355 = vpop.trf.xlu0
        %v356 = vpop.trf.xlu0
        %v357 = vpop.trf.xlu0
        %v358 = vpop.trf.xlu0
        %v359 = vpop.trf.xlu0
        %v360 = vpop.trf.xlu0
        %v361 = vpop.trf.xlu0
        %v362 = vpop.trf.xlu0
        %v363 = vpop.trf.xlu0
        %v364 = vpop.trf.xlu0
        %v365 = vpop.trf.xlu0
        %366 = xla_tuple %v318, %v350
        %367 = xla_tuple %v319, %v351
        %vm368 = vcmp.gt.s32.totalorder %v319, %v318
        %vm369 = vcmp.eq.s32.totalorder %v319, %v318
        %vm370 = vcmp.lt.s32.totalorder %v351, %v350
        %vm371 = vmand %vm369, %vm370
        %vm372 = vmor %vm368, %vm371
        %v373 = vsel %vm372, %v319, %v318
        %v374 = vsel %vm372, %v351, %v350
        %375 = xla_tuple %v373, %v374
        %376 = xla_tuple %v320, %v352
        %vm377 = vcmp.gt.s32.totalorder %v320, %v373
        %vm378 = vcmp.eq.s32.totalorder %v320, %v373
        %vm379 = vcmp.lt.s32.totalorder %v352, %v374
        %vm380 = vmand %vm378, %vm379
        %vm381 = vmor %vm377, %vm380
        %v382 = vsel %vm381, %v320, %v373
        %v383 = vsel %vm381, %v352, %v374
        %384 = xla_tuple %v382, %v383
        %385 = xla_tuple %v321, %v353
        %vm386 = vcmp.gt.s32.totalorder %v321, %v382
        %vm387 = vcmp.eq.s32.totalorder %v321, %v382
        %vm388 = vcmp.lt.s32.totalorder %v353, %v383
        %vm389 = vmand %vm387, %vm388
        %vm390 = vmor %vm386, %vm389
        %v391 = vsel %vm390, %v321, %v382
        %v392 = vsel %vm390, %v353, %v383
        %393 = xla_tuple %v391, %v392
        %394 = xla_tuple %v322, %v354
        %vm395 = vcmp.gt.s32.totalorder %v322, %v391
        %vm396 = vcmp.eq.s32.totalorder %v322, %v391
        %vm397 = vcmp.lt.s32.totalorder %v354, %v392
        %vm398 = vmand %vm396, %vm397
        %vm399 = vmor %vm395, %vm398
        %v400 = vsel %vm399, %v322, %v391
        %v401 = vsel %vm399, %v354, %v392
        %402 = xla_tuple %v400, %v401
        %403 = xla_tuple %v323, %v355
        %vm404 = vcmp.gt.s32.totalorder %v323, %v400
        %vm405 = vcmp.eq.s32.totalorder %v323, %v400
        %vm406 = vcmp.lt.s32.totalorder %v355, %v401
        %vm407 = vmand %vm405, %vm406
        %vm408 = vmor %vm404, %vm407
        %v409 = vsel %vm408, %v323, %v400
        %v410 = vsel %vm408, %v355, %v401
        %411 = xla_tuple %v409, %v410
        %412 = xla_tuple %v324, %v356
        %vm413 = vcmp.gt.s32.totalorder %v324, %v409
        %vm414 = vcmp.eq.s32.totalorder %v324, %v409
        %vm415 = vcmp.lt.s32.totalorder %v356, %v410
        %vm416 = vmand %vm414, %vm415
        %vm417 = vmor %vm413, %vm416
        %v418 = vsel %vm417, %v324, %v409
        %v419 = vsel %vm417, %v356, %v410
        %420 = xla_tuple %v418, %v419
        %421 = xla_tuple %v325, %v357
        %vm422 = vcmp.gt.s32.totalorder %v325, %v418
        %vm423 = vcmp.eq.s32.totalorder %v325, %v418
        %vm424 = vcmp.lt.s32.totalorder %v357, %v419
        %vm425 = vmand %vm423, %vm424
        %vm426 = vmor %vm422, %vm425
        %v427 = vsel %vm426, %v325, %v418
        %v428 = vsel %vm426, %v357, %v419
        %429 = xla_tuple %v427, %v428
        %430 = xla_tuple %v326, %v358
        %vm431 = vcmp.gt.s32.totalorder %v326, %v427
        %vm432 = vcmp.eq.s32.totalorder %v326, %v427
        %vm433 = vcmp.lt.s32.totalorder %v358, %v428
        %vm434 = vmand %vm432, %vm433
        %vm435 = vmor %vm431, %vm434
        %v436 = vsel %vm435, %v326, %v427
        %v437 = vsel %vm435, %v358, %v428
        %438 = xla_tuple %v436, %v437
        %439 = xla_tuple %v327, %v359
        %vm440 = vcmp.gt.s32.totalorder %v327, %v436
        %vm441 = vcmp.eq.s32.totalorder %v327, %v436
        %vm442 = vcmp.lt.s32.totalorder %v359, %v437
        %vm443 = vmand %vm441, %vm442
        %vm444 = vmor %vm440, %vm443
        %v445 = vsel %vm444, %v327, %v436
        %v446 = vsel %vm444, %v359, %v437
        %447 = xla_tuple %v445, %v446
        %448 = xla_tuple %v328, %v360
        %vm449 = vcmp.gt.s32.totalorder %v328, %v445
        %vm450 = vcmp.eq.s32.totalorder %v328, %v445
        %vm451 = vcmp.lt.s32.totalorder %v360, %v446
        %vm452 = vmand %vm450, %vm451
        %vm453 = vmor %vm449, %vm452
        %v454 = vsel %vm453, %v328, %v445
        %v455 = vsel %vm453, %v360, %v446
        %456 = xla_tuple %v454, %v455
        %457 = xla_tuple %v329, %v361
        %vm458 = vcmp.gt.s32.totalorder %v329, %v454
        %vm459 = vcmp.eq.s32.totalorder %v329, %v454
        %vm460 = vcmp.lt.s32.totalorder %v361, %v455
        %vm461 = vmand %vm459, %vm460
        %vm462 = vmor %vm458, %vm461
        %v463 = vsel %vm462, %v329, %v454
        %v464 = vsel %vm462, %v361, %v455
        %465 = xla_tuple %v463, %v464
        %466 = xla_tuple %v330, %v362
        %vm467 = vcmp.gt.s32.totalorder %v330, %v463
        %vm468 = vcmp.eq.s32.totalorder %v330, %v463
        %vm469 = vcmp.lt.s32.totalorder %v362, %v464
        %vm470 = vmand %vm468, %vm469
        %vm471 = vmor %vm467, %vm470
        %v472 = vsel %vm471, %v330, %v463
        %v473 = vsel %vm471, %v362, %v464
        %474 = xla_tuple %v472, %v473
        %475 = xla_tuple %v331, %v363
        %vm476 = vcmp.gt.s32.totalorder %v331, %v472
        %vm477 = vcmp.eq.s32.totalorder %v331, %v472
        %vm478 = vcmp.lt.s32.totalorder %v363, %v473
        %vm479 = vmand %vm477, %vm478
        %vm480 = vmor %vm476, %vm479
        %v481 = vsel %vm480, %v331, %v472
        %v482 = vsel %vm480, %v363, %v473
        %483 = xla_tuple %v481, %v482
        %484 = xla_tuple %v332, %v364
        %vm485 = vcmp.gt.s32.totalorder %v332, %v481
        %vm486 = vcmp.eq.s32.totalorder %v332, %v481
        %vm487 = vcmp.lt.s32.totalorder %v364, %v482
        %vm488 = vmand %vm486, %vm487
        %vm489 = vmor %vm485, %vm488
        %v490 = vsel %vm489, %v332, %v481
        %v491 = vsel %vm489, %v364, %v482
        %492 = xla_tuple %v490, %v491
        %493 = xla_tuple %v333, %v365
        %vm494 = vcmp.gt.s32.totalorder %v333, %v490
        %vm495 = vcmp.eq.s32.totalorder %v333, %v490
        %vm496 = vcmp.lt.s32.totalorder %v365, %v491
        %vm497 = vmand %vm495, %vm496
        %vm498 = vmor %vm494, %vm497
        %v499 = vsel %vm498, %v333, %v490
        %v500 = vsel %vm498, %v365, %v491
        %501 = xla_tuple %v499, %v500
        %v502 = vrot.slane %v499, 1
        %v503 = vrot.slane %v500, 1
        %504 = xla_tuple %v502, %v503
        %vm505 = vcmp.gt.s32.totalorder %v502, %v499
        %vm506 = vcmp.eq.s32.totalorder %v502, %v499
        %vm507 = vcmp.lt.s32.totalorder %v503, %v500
        %vm508 = vmand %vm506, %vm507
        %vm509 = vmor %vm505, %vm508
        %v510 = vsel %vm509, %v502, %v499
        %v511 = vsel %vm509, %v503, %v500
        %512 = xla_tuple %v510, %v511
        %v513 = vrot.slane %v510, 1
        %v514 = vrot.slane %v511, 1
        %515 = xla_tuple %v513, %v514
        %vm516 = vcmp.gt.s32.totalorder %v513, %v510
        %vm517 = vcmp.eq.s32.totalorder %v513, %v510
        %vm518 = vcmp.lt.s32.totalorder %v514, %v511
        %vm519 = vmand %vm517, %vm518
        %vm520 = vmor %vm516, %vm519
        %v521 = vsel %vm520, %v513, %v510
        %v522 = vsel %vm520, %v514, %v511
        %523 = xla_tuple %v521, %v522
        %v524 = vrot.slane %v521, 1
        %v525 = vrot.slane %v522, 1
        %526 = xla_tuple %v524, %v525
        %vm527 = vcmp.gt.s32.totalorder %v524, %v521
        %vm528 = vcmp.eq.s32.totalorder %v524, %v521
        %vm529 = vcmp.lt.s32.totalorder %v525, %v522
        %vm530 = vmand %vm528, %vm529
        %vm531 = vmor %vm527, %vm530
        %v532 = vsel %vm531, %v524, %v521
        %v533 = vsel %vm531, %v525, %v522
        %534 = xla_tuple %v532, %v533
        %v535 = vrot.slane %v532, 1
        %v536 = vrot.slane %v533, 1
        %537 = xla_tuple %v535, %v536
        %vm538 = vcmp.gt.s32.totalorder %v535, %v532
        %vm539 = vcmp.eq.s32.totalorder %v535, %v532
        %vm540 = vcmp.lt.s32.totalorder %v536, %v533
        %vm541 = vmand %vm539, %vm540
        %vm542 = vmor %vm538, %vm541
        %v543 = vsel %vm542, %v535, %v532
        %v544 = vsel %vm542, %v536, %v533
        %545 = xla_tuple %v543, %v544
        %v546 = vrot.slane %v543, 1
        %v547 = vrot.slane %v544, 1
        %548 = xla_tuple %v546, %v547
        %vm549 = vcmp.gt.s32.totalorder %v546, %v543
        %vm550 = vcmp.eq.s32.totalorder %v546, %v543
        %vm551 = vcmp.lt.s32.totalorder %v547, %v544
        %vm552 = vmand %vm550, %vm551
        %vm553 = vmor %vm549, %vm552
        %v554 = vsel %vm553, %v546, %v543
        %v555 = vsel %vm553, %v547, %v544
        %556 = xla_tuple %v554, %v555
        %v557 = vrot.slane %v554, 1
        %v558 = vrot.slane %v555, 1
        %559 = xla_tuple %v557, %v558
        %vm560 = vcmp.gt.s32.totalorder %v557, %v554
        %vm561 = vcmp.eq.s32.totalorder %v557, %v554
        %vm562 = vcmp.lt.s32.totalorder %v558, %v555
        %vm563 = vmand %vm561, %vm562
        %vm564 = vmor %vm560, %vm563
        %v565 = vsel %vm564, %v557, %v554
        %v566 = vsel %vm564, %v558, %v555
        %567 = xla_tuple %v565, %v566
        %v568 = vrot.slane %v565, 1
        %v569 = vrot.slane %v566, 1
        %570 = xla_tuple %v568, %v569
        %vm571 = vcmp.gt.s32.totalorder %v568, %v565
        %vm572 = vcmp.eq.s32.totalorder %v568, %v565
        %vm573 = vcmp.lt.s32.totalorder %v569, %v566
        %vm574 = vmand %vm572, %vm573
        %vm575 = vmor %vm571, %vm574
        %v576 = vsel %vm575, %v568, %v565
        %v577 = vsel %vm575, %v569, %v566
        %578 = xla_tuple %v576, %v577
        %s579 = scalar_lea.vmem [#allocation12], %s170
        %580 = vst [vmem:[%s579] sm:$0x1] %v576
        %s581 = scalar_lea.vmem [#allocation14], %s170
        %582 = vst [vmem:[%s581] sm:$0x1] %v577
        %583 = xla_tuple %580, %582
        %584 = vxpose.xlu0.b32.start [1/16] %v577, 128
        %585 = vxpose.xlu0.b32.cont [2/16] 0.0, 128
        %586 = vxpose.xlu0.b32.cont [3/16] 0.0, 128
        %587 = vxpose.xlu0.b32.cont [4/16] 0.0, 128
        %588 = vxpose.xlu0.b32.cont [5/16] 0.0, 128
        %589 = vxpose.xlu0.b32.cont [6/16] 0.0, 128
        %590 = vxpose.xlu0.b32.cont [7/16] 0.0, 128
        %591 = vxpose.xlu0.b32.cont [8/16] 0.0, 128
        %592 = vxpose.xlu0.b32.cont [9/16] 0.0, 128
        %593 = vxpose.xlu0.b32.cont [10/16] 0.0, 128
        %594 = vxpose.xlu0.b32.cont [11/16] 0.0, 128
        %595 = vxpose.xlu0.b32.cont [12/16] 0.0, 128
        %596 = vxpose.xlu0.b32.cont [13/16] 0.0, 128
        %597 = vxpose.xlu0.b32.cont [14/16] 0.0, 128
        %598 = vxpose.xlu0.b32.cont [15/16] 0.0, 128
        %599 = vxpose.xlu0.b32.end [16/16] 0.0, 128
        %v600 = vpop.trf.xlu0
        %v601 = vpop.trf.xlu0
        %v602 = vpop.trf.xlu0
        %v603 = vpop.trf.xlu0
        %v604 = vpop.trf.xlu0
        %v605 = vpop.trf.xlu0
        %v606 = vpop.trf.xlu0
        %v607 = vpop.trf.xlu0
        %v608 = vpop.trf.xlu0
        %v609 = vpop.trf.xlu0
        %v610 = vpop.trf.xlu0
        %v611 = vpop.trf.xlu0
        %v612 = vpop.trf.xlu0
        %v613 = vpop.trf.xlu0
        %v614 = vpop.trf.xlu0
        %v615 = vpop.trf.xlu0
        %s616 = vtos %v600
        %s617 = sshrl.u32 %s616, 9
        %p618 = scmp.lt.s32.totalorder %s616, 0
        %s619 = ssub.s32 0, %s616
        %s620 = scalar_select %p618, %s619, %s616
        %s621 = sand.u32 %s620, 511
        %s622 = ssub.s32 0, %s621
        %s623 = scalar_select %p618, %s622, %s621
        %s624 = sshrl.u32 %s623, 7
        %s625 = smul.u32 %s624, 256
        %s626 = sand.u32 %s623, 127
        %s627 = sadd.s32 %s625, %s626
        %v628 = vlaneseq
        %v629 = vstv %s627
        %vm631 = vcmp.eq.s32.totalorder %v628, %v629
        %s632 = smul.addr %s617, 8
        %s633 = scalar_lea.vmem [#allocation15], %s632
        %634 = vst.msk [vmem:[%s633] sm:$0xff] %vm631, 2147483648
        %s635 = smul.addr %s617, 8
        %s636 = scalar_lea.vmem [#allocation16], %s635
        %637 = vst.msk [vmem:[%s636] sm:$0xff] %vm631, 2147483647
        %638 = xla_tuple %634, %637
        %v639 = vrot.slane %v600, 1
        %s640 = vtos %v639
        %s641 = sshrl.u32 %s640, 9
        %p642 = scmp.lt.s32.totalorder %s640, 0
        %s643 = ssub.s32 0, %s640
        %s644 = scalar_select %p642, %s643, %s640
        %s645 = sand.u32 %s644, 511
        %s646 = ssub.s32 0, %s645
        %s647 = scalar_select %p642, %s646, %s645
        %s648 = sshrl.u32 %s647, 7
        %s649 = smul.u32 %s648, 256
        %s650 = sand.u32 %s647, 127
        %s651 = sadd.s32 %s649, %s650
        %v652 = vlaneseq
        %v653 = vstv %s651
        %v654 = vadd.s32 %v653, 128
        %vm655 = vcmp.eq.s32.totalorder %v652, %v654
        %s656 = smul.addr %s641, 8
        %s657 = scalar_lea.vmem [#allocation15], %s656
        %658 = vst.msk [vmem:[%s657] sm:$0xff] %vm655, 2147483648
        %s659 = smul.addr %s641, 8
        %s660 = scalar_lea.vmem [#allocation16], %s659
        %661 = vst.msk [vmem:[%s660] sm:$0xff] %vm655, 2147483647
        %662 = xla_tuple %658, %661
        %v663 = vrot.slane %v639, 1
      $region34: #{custom-call} parent=2 // loop_footer
        %s174 = sadd.s32 1, %s170
      $region35: #{custom-call} parent=2 // loop_footer_branch
        %169 = sbr.rel target = $region31
      $region36: #{custom-call} parent=2 // loop_exit
        _
      %s664 = scalar_lea.vmem [#allocation12], 8
      %s665 = scalar_lea.vmem [#allocation12], 7
      %v666 = vld [vmem:[%s665] ss:$-1 sm:$0xff]
      %s667 = scalar_lea.vmem %s664, 7 [#allocation12]
      %v668 = vld [vmem:[%s667] ss:$-1 sm:$0xff]
      %669 = vst [vmem:[#allocation12] sm:$0xff] %v668
      %670 = vst [vmem:[%s664] sm:$0xff] %v666
      %s671 = scalar_lea.vmem [#allocation14], 8
      %s672 = scalar_lea.vmem [#allocation14], 7
      %v673 = vld [vmem:[%s672] ss:$-1 sm:$0xff]
      %s674 = scalar_lea.vmem %s671, 7 [#allocation14]
      %v675 = vld [vmem:[%s674] ss:$-1 sm:$0xff]
      %676 = vst [vmem:[#allocation14] sm:$0xff] %v675
      %677 = vst [vmem:[%s671] sm:$0xff] %v673
      %678 = xla_tuple %670, %677
      %v679 = vld [vmem:[#allocation11] sm:$0xff]
      %v680 = vld [vmem:[#allocation13] sm:$0xff]
      %681 = xla_tuple %v679, %v680
      %v682 = vld [vmem:[#allocation12] sm:$0xff]
      %v683 = vld [vmem:[#allocation14] sm:$0xff]
      %684 = xla_tuple %v682, %v683
      %vm685 = vcmp.gt.s32.totalorder %v679, %v682
      %vm686 = vcmp.eq.s32.totalorder %v679, %v682
      %vm687 = vcmp.lt.s32.totalorder %v680, %v683
      %vm688 = vmand %vm686, %vm687
      %vm689 = vmor %vm685, %vm688
      %v690 = vsel %vm689, %v679, %v682
      %691 = vst [vmem:[#allocation11] sm:$0xff] %v690
      %v692 = vsel %vm689, %v682, %v679
      %693 = vst [vmem:[#allocation12] sm:$0xff] %v692
      %v694 = vsel %vm689, %v680, %v683
      %695 = vst [vmem:[#allocation13] sm:$0xff] %v694
      %v696 = vsel %vm689, %v683, %v680
      %697 = vst [vmem:[#allocation14] sm:$0xff] %v696
      %698 = xla_tuple %693, %697
      %s699 = scalar_lea.vmem [#allocation11], 8
      %v700 = vld [vmem:[%s699] sm:$0xff]
      %s701 = scalar_lea.vmem [#allocation13], 8
      %v702 = vld [vmem:[%s701] sm:$0xff]
      %703 = xla_tuple %v700, %v702
      %s704 = scalar_lea.vmem [#allocation12], 8
      %v705 = vld [vmem:[%s704] sm:$0xff]
      %s706 = scalar_lea.vmem [#allocation14], 8
      %v707 = vld [vmem:[%s706] sm:$0xff]
      %708 = xla_tuple %v705, %v707
      %vm709 = vcmp.gt.s32.totalorder %v700, %v705
      %vm710 = vcmp.eq.s32.totalorder %v700, %v705
      %vm711 = vcmp.lt.s32.totalorder %v702, %v707
      %vm712 = vmand %vm710, %vm711
      %vm713 = vmor %vm709, %vm712
      %s714 = scalar_lea.vmem [#allocation11], 8
      %v715 = vsel %vm713, %v700, %v705
      %716 = vst [vmem:[%s714] sm:$0xff] %v715
      %s717 = scalar_lea.vmem [#allocation12], 8
      %v718 = vsel %vm713, %v705, %v700
      %719 = vst [vmem:[%s717] sm:$0xff] %v718
      %s720 = scalar_lea.vmem [#allocation13], 8
      %v721 = vsel %vm713, %v702, %v707
      %722 = vst [vmem:[%s720] sm:$0xff] %v721
      %s723 = scalar_lea.vmem [#allocation14], 8
      %v724 = vsel %vm713, %v707, %v702
      %725 = vst [vmem:[%s723] sm:$0xff] %v724
      %726 = xla_tuple %719, %725
      %s727 = scalar_lea.vmem [#allocation11], 8
      %s728 = scalar_lea.vmem [#allocation13], 8
      %729 = xla_tuple %s727, %s728
      %v730 = vld [vmem:[#allocation11] sm:$0xff]
      %v731 = vld [vmem:[#allocation13] sm:$0xff]
      %732 = xla_tuple %v730, %v731
      %v733 = vld [vmem:[%s727] sm:$0xff]
      %v734 = vld [vmem:[%s728] sm:$0xff]
      %735 = xla_tuple %v733, %v734
      %vm736 = vcmp.gt.s32.totalorder %v730, %v733
      %vm737 = vcmp.eq.s32.totalorder %v730, %v733
      %vm738 = vcmp.lt.s32.totalorder %v731, %v734
      %vm739 = vmand %vm737, %vm738
      %vm740 = vmor %vm736, %vm739
      %v741 = vsel %vm740, %v730, %v733
      %742 = vst [vmem:[#allocation11] sm:$0xff] %v741
      %v743 = vsel %vm740, %v733, %v730
      %744 = vst [vmem:[%s727] sm:$0xff] %v743
      %v745 = vsel %vm740, %v731, %v734
      %746 = vst [vmem:[#allocation13] sm:$0xff] %v745
      %v747 = vsel %vm740, %v734, %v731
      %748 = vst [vmem:[%s728] sm:$0xff] %v747
      %749 = xla_tuple %744, %748
      %750 = xla_tuple [#allocation11], [#allocation13]
      %v751 = vld [vmem:[#allocation11] sm:$0xff]
      %v752 = vld [vmem:[#allocation13] sm:$0xff]
      %753 = xla_tuple %v751, %v752
      %v755 = vunpack.c.l.s4 839939668
      %v756 = vunpack.c.0.s8 %v755
      %v757 = vlaneseq
      %v758 = vshrl.u32 %v757, 7
      %v759 = vsub.s32 %v756, %v758
      %v760 = vrot.slane %v751, %v759
      %v762 = vunpack.c.l.s4 839939668
      %v763 = vunpack.c.0.s8 %v762
      %v764 = vlaneseq
      %v765 = vshrl.u32 %v764, 7
      %v766 = vsub.s32 %v763, %v765
      %v767 = vrot.slane %v752, %v766
      %768 = xla_tuple %v760, %v767
      %vm769 = vcmp.gt.s32.totalorder %v751, %v760
      %vm770 = vcmp.eq.s32.totalorder %v751, %v760
      %vm771 = vcmp.lt.s32.totalorder %v752, %v767
      %vm772 = vmand %vm770, %vm771
      %vm773 = vmor %vm769, %vm772
      %v774 = vlaneseq
      %v775 = vshrl.u32 %v774, 7
      %v776 = vand.u32 %v775, 4
      %vm777 = vcmp.ne.s32.totalorder %v776, 0
      %vm778 = vmxor %vm773, %vm777
      %v779 = vsel %vm778, %v751, %v760
      %v780 = vsel %vm778, %v752, %v767
      %781 = xla_tuple %v779, %v780
      %v783 = vunpack.c.l.s4 1417023538
      %v784 = vunpack.c.0.s8 %v783
      %v785 = vlaneseq
      %v786 = vshrl.u32 %v785, 7
      %v787 = vsub.s32 %v784, %v786
      %v788 = vrot.slane %v779, %v787
      %v790 = vunpack.c.l.s4 1417023538
      %v791 = vunpack.c.0.s8 %v790
      %v792 = vlaneseq
      %v793 = vshrl.u32 %v792, 7
      %v794 = vsub.s32 %v791, %v793
      %v795 = vrot.slane %v780, %v794
      %796 = xla_tuple %v788, %v795
      %vm797 = vcmp.gt.s32.totalorder %v779, %v788
      %vm798 = vcmp.eq.s32.totalorder %v779, %v788
      %vm799 = vcmp.lt.s32.totalorder %v780, %v795
      %vm800 = vmand %vm798, %vm799
      %vm801 = vmor %vm797, %vm800
      %v802 = vlaneseq
      %v803 = vshrl.u32 %v802, 7
      %v804 = vand.u32 %v803, 2
      %vm805 = vcmp.ne.s32.totalorder %v804, 0
      %vm806 = vmxor %vm801, %vm805
      %v807 = vsel %vm806, %v779, %v788
      %v808 = vsel %vm806, %v780, %v795
      %809 = xla_tuple %v807, %v808
      %v811 = vunpack.c.l.s4 1732584193
      %v812 = vunpack.c.0.s8 %v811
      %v813 = vlaneseq
      %v814 = vshrl.u32 %v813, 7
      %v815 = vsub.s32 %v812, %v814
      %v816 = vrot.slane %v807, %v815
      %v818 = vunpack.c.l.s4 1732584193
      %v819 = vunpack.c.0.s8 %v818
      %v820 = vlaneseq
      %v821 = vshrl.u32 %v820, 7
      %v822 = vsub.s32 %v819, %v821
      %v823 = vrot.slane %v808, %v822
      %824 = xla_tuple %v816, %v823
      %vm825 = vcmp.gt.s32.totalorder %v807, %v816
      %vm826 = vcmp.eq.s32.totalorder %v807, %v816
      %vm827 = vcmp.lt.s32.totalorder %v808, %v823
      %vm828 = vmand %vm826, %vm827
      %vm829 = vmor %vm825, %vm828
      %v830 = vlaneseq
      %v831 = vshrl.u32 %v830, 7
      %v832 = vand.u32 %v831, 1
      %vm833 = vcmp.ne.s32.totalorder %v832, 0
      %vm834 = vmxor %vm829, %vm833
      %v835 = vsel %vm834, %v807, %v816
      %v836 = vsel %vm834, %v808, %v823
      %837 = xla_tuple %v835, %v836
      %838 = vst [vmem:[#allocation11] sm:$0xff] %v835
      %839 = vst [vmem:[#allocation13] sm:$0xff] %v836
      %840 = xla_tuple %838, %839
      %v841 = vld [vmem:[#allocation11] sm:$0xff]
      %v842 = vld [vmem:[#allocation13] sm:$0xff]
      %843 = xla_tuple %v841, %v842
      %v845 = vunpack.c.l.s4 839939668
      %v846 = vunpack.c.0.s8 %v845
      %v847 = vlaneseq
      %v848 = vshrl.u32 %v847, 7
      %v849 = vsub.s32 %v846, %v848
      %v850 = vrot.slane %v841, %v849
      %v852 = vunpack.c.l.s4 839939668
      %v853 = vunpack.c.0.s8 %v852
      %v854 = vlaneseq
      %v855 = vshrl.u32 %v854, 7
      %v856 = vsub.s32 %v853, %v855
      %v857 = vrot.slane %v842, %v856
      %858 = xla_tuple %v850, %v857
      %vm859 = vcmp.gt.s32.totalorder %v841, %v850
      %vm860 = vcmp.eq.s32.totalorder %v841, %v850
      %vm861 = vcmp.lt.s32.totalorder %v842, %v857
      %vm862 = vmand %vm860, %vm861
      %vm863 = vmor %vm859, %vm862
      %v864 = vlaneseq
      %v865 = vshrl.u32 %v864, 7
      %v866 = vand.u32 %v865, 4
      %vm867 = vcmp.ne.s32.totalorder %v866, 0
      %vm868 = vmxor %vm863, %vm867
      %v869 = vsel %vm868, %v841, %v850
      %v870 = vsel %vm868, %v842, %v857
      %871 = xla_tuple %v869, %v870
      %v873 = vunpack.c.l.s4 1417023538
      %v874 = vunpack.c.0.s8 %v873
      %v875 = vlaneseq
      %v876 = vshrl.u32 %v875, 7
      %v877 = vsub.s32 %v874, %v876
      %v878 = vrot.slane %v869, %v877
      %v880 = vunpack.c.l.s4 1417023538
      %v881 = vunpack.c.0.s8 %v880
      %v882 = vlaneseq
      %v883 = vshrl.u32 %v882, 7
      %v884 = vsub.s32 %v881, %v883
      %v885 = vrot.slane %v870, %v884
      %886 = xla_tuple %v878, %v885
      %vm887 = vcmp.gt.s32.totalorder %v869, %v878
      %vm888 = vcmp.eq.s32.totalorder %v869, %v878
      %vm889 = vcmp.lt.s32.totalorder %v870, %v885
      %vm890 = vmand %vm888, %vm889
      %vm891 = vmor %vm887, %vm890
      %v892 = vlaneseq
      %v893 = vshrl.u32 %v892, 7
      %v894 = vand.u32 %v893, 2
      %vm895 = vcmp.ne.s32.totalorder %v894, 0
      %vm896 = vmxor %vm891, %vm895
      %v897 = vsel %vm896, %v869, %v878
      %v898 = vsel %vm896, %v870, %v885
      %899 = xla_tuple %v897, %v898
      %v901 = vunpack.c.l.s4 1732584193
      %v902 = vunpack.c.0.s8 %v901
      %v903 = vlaneseq
      %v904 = vshrl.u32 %v903, 7
      %v905 = vsub.s32 %v902, %v904
      %v906 = vrot.slane %v897, %v905
      %v908 = vunpack.c.l.s4 1732584193
      %v909 = vunpack.c.0.s8 %v908
      %v910 = vlaneseq
      %v911 = vshrl.u32 %v910, 7
      %v912 = vsub.s32 %v909, %v911
      %v913 = vrot.slane %v898, %v912
      %914 = xla_tuple %v906, %v913
      %vm915 = vcmp.gt.s32.totalorder %v897, %v906
      %vm916 = vcmp.eq.s32.totalorder %v897, %v906
      %vm917 = vcmp.lt.s32.totalorder %v898, %v913
      %vm918 = vmand %vm916, %vm917
      %vm919 = vmor %vm915, %vm918
      %v920 = vlaneseq
      %v921 = vshrl.u32 %v920, 7
      %v922 = vand.u32 %v921, 1
      %vm923 = vcmp.ne.s32.totalorder %v922, 0
      %vm924 = vmxor %vm919, %vm923
      %v925 = vsel %vm924, %v897, %v906
      %v926 = vsel %vm924, %v898, %v913
      %927 = xla_tuple %v925, %v926
      %928 = vst [vmem:[#allocation11] sm:$0xff] %v925
      %929 = vst [vmem:[#allocation13] sm:$0xff] %v926
      %930 = xla_tuple %928, %929
      %931 = xla_tuple %s727, %s728
      %v932 = vld [vmem:[%s727] sm:$0xff]
      %v933 = vld [vmem:[%s728] sm:$0xff]
      %934 = xla_tuple %v932, %v933
      %v936 = vunpack.c.l.s4 839939668
      %v937 = vunpack.c.0.s8 %v936
      %v938 = vlaneseq
      %v939 = vshrl.u32 %v938, 7
      %v940 = vsub.s32 %v937, %v939
      %v941 = vrot.slane %v932, %v940
      %v943 = vunpack.c.l.s4 839939668
      %v944 = vunpack.c.0.s8 %v943
      %v945 = vlaneseq
      %v946 = vshrl.u32 %v945, 7
      %v947 = vsub.s32 %v944, %v946
      %v948 = vrot.slane %v933, %v947
      %949 = xla_tuple %v941, %v948
      %vm950 = vcmp.gt.s32.totalorder %v932, %v941
      %vm951 = vcmp.eq.s32.totalorder %v932, %v941
      %vm952 = vcmp.lt.s32.totalorder %v933, %v948
      %vm953 = vmand %vm951, %vm952
      %vm954 = vmor %vm950, %vm953
      %v955 = vlaneseq
      %v956 = vshrl.u32 %v955, 7
      %v957 = vand.u32 %v956, 4
      %vm958 = vcmp.ne.s32.totalorder %v957, 0
      %vm959 = vmxor %vm954, %vm958
      %v960 = vsel %vm959, %v932, %v941
      %v961 = vsel %vm959, %v933, %v948
      %962 = xla_tuple %v960, %v961
      %v964 = vunpack.c.l.s4 1417023538
      %v965 = vunpack.c.0.s8 %v964
      %v966 = vlaneseq
      %v967 = vshrl.u32 %v966, 7
      %v968 = vsub.s32 %v965, %v967
      %v969 = vrot.slane %v960, %v968
      %v971 = vunpack.c.l.s4 1417023538
      %v972 = vunpack.c.0.s8 %v971
      %v973 = vlaneseq
      %v974 = vshrl.u32 %v973, 7
      %v975 = vsub.s32 %v972, %v974
      %v976 = vrot.slane %v961, %v975
      %977 = xla_tuple %v969, %v976
      %vm978 = vcmp.gt.s32.totalorder %v960, %v969
      %vm979 = vcmp.eq.s32.totalorder %v960, %v969
      %vm980 = vcmp.lt.s32.totalorder %v961, %v976
      %vm981 = vmand %vm979, %vm980
      %vm982 = vmor %vm978, %vm981
      %v983 = vlaneseq
      %v984 = vshrl.u32 %v983, 7
      %v985 = vand.u32 %v984, 2
      %vm986 = vcmp.ne.s32.totalorder %v985, 0
      %vm987 = vmxor %vm982, %vm986
      %v988 = vsel %vm987, %v960, %v969
      %v989 = vsel %vm987, %v961, %v976
      %990 = xla_tuple %v988, %v989
      %v992 = vunpack.c.l.s4 1732584193
      %v993 = vunpack.c.0.s8 %v992
      %v994 = vlaneseq
      %v995 = vshrl.u32 %v994, 7
      %v996 = vsub.s32 %v993, %v995
      %v997 = vrot.slane %v988, %v996
      %v999 = vunpack.c.l.s4 1732584193
      %v1000 = vunpack.c.0.s8 %v999
      %v1001 = vlaneseq
      %v1002 = vshrl.u32 %v1001, 7
      %v1003 = vsub.s32 %v1000, %v1002
      %v1004 = vrot.slane %v989, %v1003
      %1005 = xla_tuple %v997, %v1004
      %vm1006 = vcmp.gt.s32.totalorder %v988, %v997
      %vm1007 = vcmp.eq.s32.totalorder %v988, %v997
      %vm1008 = vcmp.lt.s32.totalorder %v989, %v1004
      %vm1009 = vmand %vm1007, %vm1008
      %vm1010 = vmor %vm1006, %vm1009
      %v1011 = vlaneseq
      %v1012 = vshrl.u32 %v1011, 7
      %v1013 = vand.u32 %v1012, 1
      %vm1014 = vcmp.ne.s32.totalorder %v1013, 0
      %vm1015 = vmxor %vm1010, %vm1014
      %v1016 = vsel %vm1015, %v988, %v997
      %v1017 = vsel %vm1015, %v989, %v1004
      %1018 = xla_tuple %v1016, %v1017
      %1019 = vst [vmem:[%s727] sm:$0xff] %v1016
      %1020 = vst [vmem:[%s728] sm:$0xff] %v1017
      %1021 = xla_tuple %1019, %1020
      %v1022 = vld [vmem:[%s727] sm:$0xff]
      %v1023 = vld [vmem:[%s728] sm:$0xff]
      %1024 = xla_tuple %v1022, %v1023
      %v1026 = vunpack.c.l.s4 839939668
      %v1027 = vunpack.c.0.s8 %v1026
      %v1028 = vlaneseq
      %v1029 = vshrl.u32 %v1028, 7
      %v1030 = vsub.s32 %v1027, %v1029
      %v1031 = vrot.slane %v1022, %v1030
      %v1033 = vunpack.c.l.s4 839939668
      %v1034 = vunpack.c.0.s8 %v1033
      %v1035 = vlaneseq
      %v1036 = vshrl.u32 %v1035, 7
      %v1037 = vsub.s32 %v1034, %v1036
      %v1038 = vrot.slane %v1023, %v1037
      %1039 = xla_tuple %v1031, %v1038
      %vm1040 = vcmp.gt.s32.totalorder %v1022, %v1031
      %vm1041 = vcmp.eq.s32.totalorder %v1022, %v1031
      %vm1042 = vcmp.lt.s32.totalorder %v1023, %v1038
      %vm1043 = vmand %vm1041, %vm1042
      %vm1044 = vmor %vm1040, %vm1043
      %v1045 = vlaneseq
      %v1046 = vshrl.u32 %v1045, 7
      %v1047 = vand.u32 %v1046, 4
      %vm1048 = vcmp.ne.s32.totalorder %v1047, 0
      %vm1049 = vmxor %vm1044, %vm1048
      %v1050 = vsel %vm1049, %v1022, %v1031
      %v1051 = vsel %vm1049, %v1023, %v1038
      %1052 = xla_tuple %v1050, %v1051
      %v1054 = vunpack.c.l.s4 1417023538
      %v1055 = vunpack.c.0.s8 %v1054
      %v1056 = vlaneseq
      %v1057 = vshrl.u32 %v1056, 7
      %v1058 = vsub.s32 %v1055, %v1057
      %v1059 = vrot.slane %v1050, %v1058
      %v1061 = vunpack.c.l.s4 1417023538
      %v1062 = vunpack.c.0.s8 %v1061
      %v1063 = vlaneseq
      %v1064 = vshrl.u32 %v1063, 7
      %v1065 = vsub.s32 %v1062, %v1064
      %v1066 = vrot.slane %v1051, %v1065
      %1067 = xla_tuple %v1059, %v1066
      %vm1068 = vcmp.gt.s32.totalorder %v1050, %v1059
      %vm1069 = vcmp.eq.s32.totalorder %v1050, %v1059
      %vm1070 = vcmp.lt.s32.totalorder %v1051, %v1066
      %vm1071 = vmand %vm1069, %vm1070
      %vm1072 = vmor %vm1068, %vm1071
      %v1073 = vlaneseq
      %v1074 = vshrl.u32 %v1073, 7
      %v1075 = vand.u32 %v1074, 2
      %vm1076 = vcmp.ne.s32.totalorder %v1075, 0
      %vm1077 = vmxor %vm1072, %vm1076
      %v1078 = vsel %vm1077, %v1050, %v1059
      %v1079 = vsel %vm1077, %v1051, %v1066
      %1080 = xla_tuple %v1078, %v1079
      %v1082 = vunpack.c.l.s4 1732584193
      %v1083 = vunpack.c.0.s8 %v1082
      %v1084 = vlaneseq
      %v1085 = vshrl.u32 %v1084, 7
      %v1086 = vsub.s32 %v1083, %v1085
      %v1087 = vrot.slane %v1078, %v1086
      %v1089 = vunpack.c.l.s4 1732584193
      %v1090 = vunpack.c.0.s8 %v1089
      %v1091 = vlaneseq
      %v1092 = vshrl.u32 %v1091, 7
      %v1093 = vsub.s32 %v1090, %v1092
      %v1094 = vrot.slane %v1079, %v1093
      %1095 = xla_tuple %v1087, %v1094
      %vm1096 = vcmp.gt.s32.totalorder %v1078, %v1087
      %vm1097 = vcmp.eq.s32.totalorder %v1078, %v1087
      %vm1098 = vcmp.lt.s32.totalorder %v1079, %v1094
      %vm1099 = vmand %vm1097, %vm1098
      %vm1100 = vmor %vm1096, %vm1099
      %v1101 = vlaneseq
      %v1102 = vshrl.u32 %v1101, 7
      %v1103 = vand.u32 %v1102, 1
      %vm1104 = vcmp.ne.s32.totalorder %v1103, 0
      %vm1105 = vmxor %vm1100, %vm1104
      %v1106 = vsel %vm1105, %v1078, %v1087
      %v1107 = vsel %vm1105, %v1079, %v1094
      %1108 = xla_tuple %v1106, %v1107
      %1109 = vst [vmem:[%s727] sm:$0xff] %v1106
      %1110 = vst [vmem:[%s728] sm:$0xff] %v1107
      %1111 = xla_tuple %1109, %1110
      %s1112 = scalar_lea.vmem [#allocation12], 8
      %s1113 = scalar_lea.vmem [#allocation14], 8
      %1114 = xla_tuple %s1112, %s1113
      %v1115 = vld [vmem:[#allocation12] sm:$0xff]
      %v1116 = vld [vmem:[#allocation14] sm:$0xff]
      %1117 = xla_tuple %v1115, %v1116
      %v1118 = vld [vmem:[%s1112] sm:$0xff]
      %v1119 = vld [vmem:[%s1113] sm:$0xff]
      %1120 = xla_tuple %v1118, %v1119
      %vm1121 = vcmp.gt.s32.totalorder %v1115, %v1118
      %vm1122 = vcmp.eq.s32.totalorder %v1115, %v1118
      %vm1123 = vcmp.lt.s32.totalorder %v1116, %v1119
      %vm1124 = vmand %vm1122, %vm1123
      %vm1125 = vmor %vm1121, %vm1124
      %v1126 = vsel %vm1125, %v1115, %v1118
      %1127 = vst [vmem:[#allocation12] sm:$0xff] %v1126
      %v1128 = vsel %vm1125, %v1118, %v1115
      %1129 = vst [vmem:[%s1112] sm:$0xff] %v1128
      %v1130 = vsel %vm1125, %v1116, %v1119
      %1131 = vst [vmem:[#allocation14] sm:$0xff] %v1130
      %v1132 = vsel %vm1125, %v1119, %v1116
      %1133 = vst [vmem:[%s1113] sm:$0xff] %v1132
      %1134 = xla_tuple %1129, %1133
      %1135 = xla_tuple [#allocation12], [#allocation14]
      %v1136 = vld [vmem:[#allocation12] sm:$0xff]
      %v1137 = vld [vmem:[#allocation14] sm:$0xff]
      %1138 = xla_tuple %v1136, %v1137
      %v1140 = vunpack.c.l.s4 839939668
      %v1141 = vunpack.c.0.s8 %v1140
      %v1142 = vlaneseq
      %v1143 = vshrl.u32 %v1142, 7
      %v1144 = vsub.s32 %v1141, %v1143
      %v1145 = vrot.slane %v1136, %v1144
      %v1147 = vunpack.c.l.s4 839939668
      %v1148 = vunpack.c.0.s8 %v1147
      %v1149 = vlaneseq
      %v1150 = vshrl.u32 %v1149, 7
      %v1151 = vsub.s32 %v1148, %v1150
      %v1152 = vrot.slane %v1137, %v1151
      %1153 = xla_tuple %v1145, %v1152
      %vm1154 = vcmp.gt.s32.totalorder %v1136, %v1145
      %vm1155 = vcmp.eq.s32.totalorder %v1136, %v1145
      %vm1156 = vcmp.lt.s32.totalorder %v1137, %v1152
      %vm1157 = vmand %vm1155, %vm1156
      %vm1158 = vmor %vm1154, %vm1157
      %v1159 = vlaneseq
      %v1160 = vshrl.u32 %v1159, 7
      %v1161 = vand.u32 %v1160, 4
      %vm1162 = vcmp.ne.s32.totalorder %v1161, 0
      %vm1163 = vmxor %vm1158, %vm1162
      %v1164 = vsel %vm1163, %v1136, %v1145
      %v1165 = vsel %vm1163, %v1137, %v1152
      %1166 = xla_tuple %v1164, %v1165
      %v1168 = vunpack.c.l.s4 1417023538
      %v1169 = vunpack.c.0.s8 %v1168
      %v1170 = vlaneseq
      %v1171 = vshrl.u32 %v1170, 7
      %v1172 = vsub.s32 %v1169, %v1171
      %v1173 = vrot.slane %v1164, %v1172
      %v1175 = vunpack.c.l.s4 1417023538
      %v1176 = vunpack.c.0.s8 %v1175
      %v1177 = vlaneseq
      %v1178 = vshrl.u32 %v1177, 7
      %v1179 = vsub.s32 %v1176, %v1178
      %v1180 = vrot.slane %v1165, %v1179
      %1181 = xla_tuple %v1173, %v1180
      %vm1182 = vcmp.gt.s32.totalorder %v1164, %v1173
      %vm1183 = vcmp.eq.s32.totalorder %v1164, %v1173
      %vm1184 = vcmp.lt.s32.totalorder %v1165, %v1180
      %vm1185 = vmand %vm1183, %vm1184
      %vm1186 = vmor %vm1182, %vm1185
      %v1187 = vlaneseq
      %v1188 = vshrl.u32 %v1187, 7
      %v1189 = vand.u32 %v1188, 2
      %vm1190 = vcmp.ne.s32.totalorder %v1189, 0
      %vm1191 = vmxor %vm1186, %vm1190
      %v1192 = vsel %vm1191, %v1164, %v1173
      %v1193 = vsel %vm1191, %v1165, %v1180
      %1194 = xla_tuple %v1192, %v1193
      %v1196 = vunpack.c.l.s4 1732584193
      %v1197 = vunpack.c.0.s8 %v1196
      %v1198 = vlaneseq
      %v1199 = vshrl.u32 %v1198, 7
      %v1200 = vsub.s32 %v1197, %v1199
      %v1201 = vrot.slane %v1192, %v1200
      %v1203 = vunpack.c.l.s4 1732584193
      %v1204 = vunpack.c.0.s8 %v1203
      %v1205 = vlaneseq
      %v1206 = vshrl.u32 %v1205, 7
      %v1207 = vsub.s32 %v1204, %v1206
      %v1208 = vrot.slane %v1193, %v1207
      %1209 = xla_tuple %v1201, %v1208
      %vm1210 = vcmp.gt.s32.totalorder %v1192, %v1201
      %vm1211 = vcmp.eq.s32.totalorder %v1192, %v1201
      %vm1212 = vcmp.lt.s32.totalorder %v1193, %v1208
      %vm1213 = vmand %vm1211, %vm1212
      %vm1214 = vmor %vm1210, %vm1213
      %v1215 = vlaneseq
      %v1216 = vshrl.u32 %v1215, 7
      %v1217 = vand.u32 %v1216, 1
      %vm1218 = vcmp.ne.s32.totalorder %v1217, 0
      %vm1219 = vmxor %vm1214, %vm1218
      %v1220 = vsel %vm1219, %v1192, %v1201
      %v1221 = vsel %vm1219, %v1193, %v1208
      %1222 = xla_tuple %v1220, %v1221
      %1223 = vst [vmem:[#allocation12] sm:$0xff] %v1220
      %1224 = vst [vmem:[#allocation14] sm:$0xff] %v1221
      %1225 = xla_tuple %1223, %1224
      %v1226 = vld [vmem:[#allocation12] sm:$0xff]
      %v1227 = vld [vmem:[#allocation14] sm:$0xff]
      %1228 = xla_tuple %v1226, %v1227
      %v1230 = vunpack.c.l.s4 839939668
      %v1231 = vunpack.c.0.s8 %v1230
      %v1232 = vlaneseq
      %v1233 = vshrl.u32 %v1232, 7
      %v1234 = vsub.s32 %v1231, %v1233
      %v1235 = vrot.slane %v1226, %v1234
      %v1237 = vunpack.c.l.s4 839939668
      %v1238 = vunpack.c.0.s8 %v1237
      %v1239 = vlaneseq
      %v1240 = vshrl.u32 %v1239, 7
      %v1241 = vsub.s32 %v1238, %v1240
      %v1242 = vrot.slane %v1227, %v1241
      %1243 = xla_tuple %v1235, %v1242
      %vm1244 = vcmp.gt.s32.totalorder %v1226, %v1235
      %vm1245 = vcmp.eq.s32.totalorder %v1226, %v1235
      %vm1246 = vcmp.lt.s32.totalorder %v1227, %v1242
      %vm1247 = vmand %vm1245, %vm1246
      %vm1248 = vmor %vm1244, %vm1247
      %v1249 = vlaneseq
      %v1250 = vshrl.u32 %v1249, 7
      %v1251 = vand.u32 %v1250, 4
      %vm1252 = vcmp.ne.s32.totalorder %v1251, 0
      %vm1253 = vmxor %vm1248, %vm1252
      %v1254 = vsel %vm1253, %v1226, %v1235
      %v1255 = vsel %vm1253, %v1227, %v1242
      %1256 = xla_tuple %v1254, %v1255
      %v1258 = vunpack.c.l.s4 1417023538
      %v1259 = vunpack.c.0.s8 %v1258
      %v1260 = vlaneseq
      %v1261 = vshrl.u32 %v1260, 7
      %v1262 = vsub.s32 %v1259, %v1261
      %v1263 = vrot.slane %v1254, %v1262
      %v1265 = vunpack.c.l.s4 1417023538
      %v1266 = vunpack.c.0.s8 %v1265
      %v1267 = vlaneseq
      %v1268 = vshrl.u32 %v1267, 7
      %v1269 = vsub.s32 %v1266, %v1268
      %v1270 = vrot.slane %v1255, %v1269
      %1271 = xla_tuple %v1263, %v1270
      %vm1272 = vcmp.gt.s32.totalorder %v1254, %v1263
      %vm1273 = vcmp.eq.s32.totalorder %v1254, %v1263
      %vm1274 = vcmp.lt.s32.totalorder %v1255, %v1270
      %vm1275 = vmand %vm1273, %vm1274
      %vm1276 = vmor %vm1272, %vm1275
      %v1277 = vlaneseq
      %v1278 = vshrl.u32 %v1277, 7
      %v1279 = vand.u32 %v1278, 2
      %vm1280 = vcmp.ne.s32.totalorder %v1279, 0
      %vm1281 = vmxor %vm1276, %vm1280
      %v1282 = vsel %vm1281, %v1254, %v1263
      %v1283 = vsel %vm1281, %v1255, %v1270
      %1284 = xla_tuple %v1282, %v1283
      %v1286 = vunpack.c.l.s4 1732584193
      %v1287 = vunpack.c.0.s8 %v1286
      %v1288 = vlaneseq
      %v1289 = vshrl.u32 %v1288, 7
      %v1290 = vsub.s32 %v1287, %v1289
      %v1291 = vrot.slane %v1282, %v1290
      %v1293 = vunpack.c.l.s4 1732584193
      %v1294 = vunpack.c.0.s8 %v1293
      %v1295 = vlaneseq
      %v1296 = vshrl.u32 %v1295, 7
      %v1297 = vsub.s32 %v1294, %v1296
      %v1298 = vrot.slane %v1283, %v1297
      %1299 = xla_tuple %v1291, %v1298
      %vm1300 = vcmp.gt.s32.totalorder %v1282, %v1291
      %vm1301 = vcmp.eq.s32.totalorder %v1282, %v1291
      %vm1302 = vcmp.lt.s32.totalorder %v1283, %v1298
      %vm1303 = vmand %vm1301, %vm1302
      %vm1304 = vmor %vm1300, %vm1303
      %v1305 = vlaneseq
      %v1306 = vshrl.u32 %v1305, 7
      %v1307 = vand.u32 %v1306, 1
      %vm1308 = vcmp.ne.s32.totalorder %v1307, 0
      %vm1309 = vmxor %vm1304, %vm1308
      %v1310 = vsel %vm1309, %v1282, %v1291
      %v1311 = vsel %vm1309, %v1283, %v1298
      %1312 = xla_tuple %v1310, %v1311
      %1313 = vst [vmem:[#allocation12] sm:$0xff] %v1310
      %1314 = vst [vmem:[#allocation14] sm:$0xff] %v1311
      %1315 = xla_tuple %1313, %1314
      %1316 = xla_tuple %s1112, %s1113
      %v1317 = vld [vmem:[%s1112] sm:$0xff]
      %v1318 = vld [vmem:[%s1113] sm:$0xff]
      %1319 = xla_tuple %v1317, %v1318
      %v1321 = vunpack.c.l.s4 839939668
      %v1322 = vunpack.c.0.s8 %v1321
      %v1323 = vlaneseq
      %v1324 = vshrl.u32 %v1323, 7
      %v1325 = vsub.s32 %v1322, %v1324
      %v1326 = vrot.slane %v1317, %v1325
      %v1328 = vunpack.c.l.s4 839939668
      %v1329 = vunpack.c.0.s8 %v1328
      %v1330 = vlaneseq
      %v1331 = vshrl.u32 %v1330, 7
      %v1332 = vsub.s32 %v1329, %v1331
      %v1333 = vrot.slane %v1318, %v1332
      %1334 = xla_tuple %v1326, %v1333
      %vm1335 = vcmp.gt.s32.totalorder %v1317, %v1326
      %vm1336 = vcmp.eq.s32.totalorder %v1317, %v1326
      %vm1337 = vcmp.lt.s32.totalorder %v1318, %v1333
      %vm1338 = vmand %vm1336, %vm1337
      %vm1339 = vmor %vm1335, %vm1338
      %v1340 = vlaneseq
      %v1341 = vshrl.u32 %v1340, 7
      %v1342 = vand.u32 %v1341, 4
      %vm1343 = vcmp.ne.s32.totalorder %v1342, 0
      %vm1344 = vmxor %vm1339, %vm1343
      %v1345 = vsel %vm1344, %v1317, %v1326
      %v1346 = vsel %vm1344, %v1318, %v1333
      %1347 = xla_tuple %v1345, %v1346
      %v1349 = vunpack.c.l.s4 1417023538
      %v1350 = vunpack.c.0.s8 %v1349
      %v1351 = vlaneseq
      %v1352 = vshrl.u32 %v1351, 7
      %v1353 = vsub.s32 %v1350, %v1352
      %v1354 = vrot.slane %v1345, %v1353
      %v1356 = vunpack.c.l.s4 1417023538
      %v1357 = vunpack.c.0.s8 %v1356
      %v1358 = vlaneseq
      %v1359 = vshrl.u32 %v1358, 7
      %v1360 = vsub.s32 %v1357, %v1359
      %v1361 = vrot.slane %v1346, %v1360
      %1362 = xla_tuple %v1354, %v1361
      %vm1363 = vcmp.gt.s32.totalorder %v1345, %v1354
      %vm1364 = vcmp.eq.s32.totalorder %v1345, %v1354
      %vm1365 = vcmp.lt.s32.totalorder %v1346, %v1361
      %vm1366 = vmand %vm1364, %vm1365
      %vm1367 = vmor %vm1363, %vm1366
      %v1368 = vlaneseq
      %v1369 = vshrl.u32 %v1368, 7
      %v1370 = vand.u32 %v1369, 2
      %vm1371 = vcmp.ne.s32.totalorder %v1370, 0
      %vm1372 = vmxor %vm1367, %vm1371
      %v1373 = vsel %vm1372, %v1345, %v1354
      %v1374 = vsel %vm1372, %v1346, %v1361
      %1375 = xla_tuple %v1373, %v1374
      %v1377 = vunpack.c.l.s4 1732584193
      %v1378 = vunpack.c.0.s8 %v1377
      %v1379 = vlaneseq
      %v1380 = vshrl.u32 %v1379, 7
      %v1381 = vsub.s32 %v1378, %v1380
      %v1382 = vrot.slane %v1373, %v1381
      %v1384 = vunpack.c.l.s4 1732584193
      %v1385 = vunpack.c.0.s8 %v1384
      %v1386 = vlaneseq
      %v1387 = vshrl.u32 %v1386, 7
      %v1388 = vsub.s32 %v1385, %v1387
      %v1389 = vrot.slane %v1374, %v1388
      %1390 = xla_tuple %v1382, %v1389
      %vm1391 = vcmp.gt.s32.totalorder %v1373, %v1382
      %vm1392 = vcmp.eq.s32.totalorder %v1373, %v1382
      %vm1393 = vcmp.lt.s32.totalorder %v1374, %v1389
      %vm1394 = vmand %vm1392, %vm1393
      %vm1395 = vmor %vm1391, %vm1394
      %v1396 = vlaneseq
      %v1397 = vshrl.u32 %v1396, 7
      %v1398 = vand.u32 %v1397, 1
      %vm1399 = vcmp.ne.s32.totalorder %v1398, 0
      %vm1400 = vmxor %vm1395, %vm1399
      %v1401 = vsel %vm1400, %v1373, %v1382
      %v1402 = vsel %vm1400, %v1374, %v1389
      %1403 = xla_tuple %v1401, %v1402
      %1404 = vst [vmem:[%s1112] sm:$0xff] %v1401
      %1405 = vst [vmem:[%s1113] sm:$0xff] %v1402
      %1406 = xla_tuple %1404, %1405
      %v1407 = vld [vmem:[%s1112] sm:$0xff]
      %v1408 = vld [vmem:[%s1113] sm:$0xff]
      %1409 = xla_tuple %v1407, %v1408
      %v1411 = vunpack.c.l.s4 839939668
      %v1412 = vunpack.c.0.s8 %v1411
      %v1413 = vlaneseq
      %v1414 = vshrl.u32 %v1413, 7
      %v1415 = vsub.s32 %v1412, %v1414
      %v1416 = vrot.slane %v1407, %v1415
      %v1418 = vunpack.c.l.s4 839939668
      %v1419 = vunpack.c.0.s8 %v1418
      %v1420 = vlaneseq
      %v1421 = vshrl.u32 %v1420, 7
      %v1422 = vsub.s32 %v1419, %v1421
      %v1423 = vrot.slane %v1408, %v1422
      %1424 = xla_tuple %v1416, %v1423
      %vm1425 = vcmp.gt.s32.totalorder %v1407, %v1416
      %vm1426 = vcmp.eq.s32.totalorder %v1407, %v1416
      %vm1427 = vcmp.lt.s32.totalorder %v1408, %v1423
      %vm1428 = vmand %vm1426, %vm1427
      %vm1429 = vmor %vm1425, %vm1428
      %v1430 = vlaneseq
      %v1431 = vshrl.u32 %v1430, 7
      %v1432 = vand.u32 %v1431, 4
      %vm1433 = vcmp.ne.s32.totalorder %v1432, 0
      %vm1434 = vmxor %vm1429, %vm1433
      %v1435 = vsel %vm1434, %v1407, %v1416
      %v1436 = vsel %vm1434, %v1408, %v1423
      %1437 = xla_tuple %v1435, %v1436
      %v1439 = vunpack.c.l.s4 1417023538
      %v1440 = vunpack.c.0.s8 %v1439
      %v1441 = vlaneseq
      %v1442 = vshrl.u32 %v1441, 7
      %v1443 = vsub.s32 %v1440, %v1442
      %v1444 = vrot.slane %v1435, %v1443
      %v1446 = vunpack.c.l.s4 1417023538
      %v1447 = vunpack.c.0.s8 %v1446
      %v1448 = vlaneseq
      %v1449 = vshrl.u32 %v1448, 7
      %v1450 = vsub.s32 %v1447, %v1449
      %v1451 = vrot.slane %v1436, %v1450
      %1452 = xla_tuple %v1444, %v1451
      %vm1453 = vcmp.gt.s32.totalorder %v1435, %v1444
      %vm1454 = vcmp.eq.s32.totalorder %v1435, %v1444
      %vm1455 = vcmp.lt.s32.totalorder %v1436, %v1451
      %vm1456 = vmand %vm1454, %vm1455
      %vm1457 = vmor %vm1453, %vm1456
      %v1458 = vlaneseq
      %v1459 = vshrl.u32 %v1458, 7
      %v1460 = vand.u32 %v1459, 2
      %vm1461 = vcmp.ne.s32.totalorder %v1460, 0
      %vm1462 = vmxor %vm1457, %vm1461
      %v1463 = vsel %vm1462, %v1435, %v1444
      %v1464 = vsel %vm1462, %v1436, %v1451
      %1465 = xla_tuple %v1463, %v1464
      %v1467 = vunpack.c.l.s4 1732584193
      %v1468 = vunpack.c.0.s8 %v1467
      %v1469 = vlaneseq
      %v1470 = vshrl.u32 %v1469, 7
      %v1471 = vsub.s32 %v1468, %v1470
      %v1472 = vrot.slane %v1463, %v1471
      %v1474 = vunpack.c.l.s4 1732584193
      %v1475 = vunpack.c.0.s8 %v1474
      %v1476 = vlaneseq
      %v1477 = vshrl.u32 %v1476, 7
      %v1478 = vsub.s32 %v1475, %v1477
      %v1479 = vrot.slane %v1464, %v1478
      %1480 = xla_tuple %v1472, %v1479
      %vm1481 = vcmp.gt.s32.totalorder %v1463, %v1472
      %vm1482 = vcmp.eq.s32.totalorder %v1463, %v1472
      %vm1483 = vcmp.lt.s32.totalorder %v1464, %v1479
      %vm1484 = vmand %vm1482, %vm1483
      %vm1485 = vmor %vm1481, %vm1484
      %v1486 = vlaneseq
      %v1487 = vshrl.u32 %v1486, 7
      %v1488 = vand.u32 %v1487, 1
      %vm1489 = vcmp.ne.s32.totalorder %v1488, 0
      %vm1490 = vmxor %vm1485, %vm1489
      %v1491 = vsel %vm1490, %v1463, %v1472
      %v1492 = vsel %vm1490, %v1464, %v1479
      %1493 = xla_tuple %v1491, %v1492
      %1494 = vst [vmem:[%s1112] sm:$0xff] %v1491
      %1495 = vst [vmem:[%s1113] sm:$0xff] %v1492
      %1496 = xla_tuple %1494, %1495
    %v1497 = vld [vmem:[#allocation11] sm:$0xff]
    %vm1498 = vcmp.lt.s32.totalorder %v1497, 0
    %v1499 = vsub.s32 2147483647, %v1497
    %v1500 = vsel %vm1498, %v1499, %v1497
    %1501 = vst [vmem:[#allocation11] sm:$0xff] %v1500
    %s1502 = scalar_lea.vmem [#allocation11], 8
    %v1503 = vld [vmem:[%s1502] sm:$0xff]
    %vm1504 = vcmp.lt.s32.totalorder %v1503, 0
    %v1505 = vsub.s32 2147483647, %v1503
    %v1506 = vsel %vm1504, %v1505, %v1503
    %1507 = vst [vmem:[%s1502] sm:$0xff] %v1506
    %v1508 = vld [vmem:[#allocation11] sm:$0xff]
    %s1509 = scalar_lea.vmem [#allocation11], 8
    %v1510 = vld [vmem:[%s1509] sm:$0xff]
    %1511 = vxpose.xlu0.b32.start [1/2] (short) %v1508, 128
    %1512 = vxpose.xlu0.b32.end [2/2] (short) %v1510, 128
    %v1513 = vpop.trf.xlu0
    %v1514 = vpop.trf.xlu0
    %v1515 = vpop.trf.xlu0
    %v1516 = vpop.trf.xlu0
    %v1517 = vpop.trf.xlu0
    %v1518 = vpop.trf.xlu0
    %v1519 = vpop.trf.xlu0
    %v1520 = vpop.trf.xlu0
    %v1521 = vpop.trf.xlu0
    %v1522 = vpop.trf.xlu0
    %v1523 = vpop.trf.xlu0
    %v1524 = vpop.trf.xlu0
    %v1525 = vpop.trf.xlu0
    %v1526 = vpop.trf.xlu0
    %v1527 = vpop.trf.xlu0
    %v1528 = vpop.trf.xlu0
    %1529 = vst [vmem:[#allocation7] sm:$0xff] %v1513
    %v1530 = vld [vmem:[#allocation13] sm:$0xff]
    %s1531 = scalar_lea.vmem [#allocation13], 8
    %v1532 = vld [vmem:[%s1531] sm:$0xff]
    %1533 = vxpose.xlu0.b32.start [1/2] (short) %v1530, 128
    %1534 = vxpose.xlu0.b32.end [2/2] (short) %v1532, 128
    %v1535 = vpop.trf.xlu0
    %v1536 = vpop.trf.xlu0
    %v1537 = vpop.trf.xlu0
    %v1538 = vpop.trf.xlu0
    %v1539 = vpop.trf.xlu0
    %v1540 = vpop.trf.xlu0
    %v1541 = vpop.trf.xlu0
    %v1542 = vpop.trf.xlu0
    %v1543 = vpop.trf.xlu0
    %v1544 = vpop.trf.xlu0
    %v1545 = vpop.trf.xlu0
    %v1546 = vpop.trf.xlu0
    %v1547 = vpop.trf.xlu0
    %v1548 = vpop.trf.xlu0
    %v1549 = vpop.trf.xlu0
    %v1550 = vpop.trf.xlu0
    %1551 = vst [vmem:[#allocation9] sm:$0xff] %v1535
    %s1553 = sshllo.u32 0, 2
    %v1555 = vld [vmem:[#allocation7] sm:%s1553]
    %s1556 = sshllo.u32 0, 2
    %1557 = vst [vmem:[#allocation8] sm:%s1556] %v1555
    %s1559 = sshllo.u32 0, 2
    %v1561 = vld [vmem:[#allocation9] sm:%s1559]
    %s1562 = sshllo.u32 0, 2
    %1563 = vst [vmem:[#allocation10] sm:%s1562] %v1561
    // Predicated region
    $region37: #{custom-call} parent=1 // pred_check
      _
    $region38: #{custom-call} parent=1 // pred_check_branch
      %1565 = sbr.rel (0) target = $region40
    $region39: #{custom-call} parent=1 // pred_region
      // Predicated region
      $region41: #{custom-call} parent=39 // pred_check
        _
      $region42: #{custom-call} parent=39 // pred_check_branch
        %1567 = sbr.rel target = $region44
      $region43: #{custom-call} parent=39 // pred_region
        // Predicated region
        $region56: #{custom-call} parent=43 // pred_check
          _
        $region57: #{custom-call} parent=43 // pred_check_branch
          %1582 = sbr.rel (0) target = $region59
        $region58: #{custom-call} parent=43 // pred_region
          loop: start=0, step=1, limit=1
          $region60: #{custom-call} parent=58 // loop_pre_header
            _
          $region61: #{custom-call} parent=58 // loop_header
            %s1585 = sphi 0, %s1589
            %p1586 = scmp.ge.s32.totalorder %s1585, 1
            %s1590 = sphi [#allocation8], [#allocation8]
            %s1591 = sphi %s1, %s1
          $region62: #{custom-call} parent=58 // loop_header_branch
            %1588 = sbr.rel (%p1586) target = $region66
          $region63: #{custom-call} parent=58 // loop_body
            %v1592 = vld [vmem:[%s1590] sm:$0x3]
            %1593 = vst [vmem:[%s1591] sm:$0x3] %v1592
          $region64: #{custom-call} parent=58 // loop_footer
            %s1589 = sadd.s32 1, %s1585
          $region65: #{custom-call} parent=58 // loop_footer_branch
            %1584 = sbr.rel target = $region61
          $region66: #{custom-call} parent=58 // loop_exit
            _
        $region59: #{custom-call} parent=43 // pred_fallthru
          _
      $region44: #{custom-call} parent=39 // pred_fallthru
        _
      // Predicated region
      $region45: #{custom-call} parent=39 // pred_check
        _
      $region46: #{custom-call} parent=39 // pred_check_branch
        %1569 = sbr.rel (0) target = $region48
      $region47: #{custom-call} parent=39 // pred_region
        loop: start=0, step=1, limit=1
        $region49: #{custom-call} parent=47 // loop_pre_header
          _
        $region50: #{custom-call} parent=47 // loop_header
          %s1572 = sphi 0, %s1576
          %p1573 = scmp.ge.s32.totalorder %s1572, 1
          %s1577 = sphi [#allocation8], [#allocation8]
          %s1578 = sphi %s1, %s1
        $region51: #{custom-call} parent=47 // loop_header_branch
          %1575 = sbr.rel (%p1573) target = $region55
        $region52: #{custom-call} parent=47 // loop_body
          %v1579 = vld [vmem:[%s1577] sm:$0x3]
          %1580 = vst [vmem:[%s1578] sm:$0x3] %v1579
        $region53: #{custom-call} parent=47 // loop_footer
          %s1576 = sadd.s32 1, %s1572
        $region54: #{custom-call} parent=47 // loop_footer_branch
          %1571 = sbr.rel target = $region50
        $region55: #{custom-call} parent=47 // loop_exit
          _
      $region48: #{custom-call} parent=39 // pred_fallthru
        _
    $region40: #{custom-call} parent=1 // pred_fallthru
      _
    %1594 = vnop
    // Predicated region
    $region67: #{custom-call} parent=1 // pred_check
      _
    $region68: #{custom-call} parent=1 // pred_check_branch
      %1596 = sbr.rel (0) target = $region70
    $region69: #{custom-call} parent=1 // pred_region
      // Predicated region
      $region71: #{custom-call} parent=69 // pred_check
        _
      $region72: #{custom-call} parent=69 // pred_check_branch
        %1598 = sbr.rel target = $region74
      $region73: #{custom-call} parent=69 // pred_region
        // Predicated region
        $region86: #{custom-call} parent=73 // pred_check
          _
        $region87: #{custom-call} parent=73 // pred_check_branch
          %1613 = sbr.rel (0) target = $region89
        $region88: #{custom-call} parent=73 // pred_region
          loop: start=0, step=1, limit=1
          $region90: #{custom-call} parent=88 // loop_pre_header
            _
          $region91: #{custom-call} parent=88 // loop_header
            %s1616 = sphi 0, %s1620
            %p1617 = scmp.ge.s32.totalorder %s1616, 1
            %s1621 = sphi [#allocation10], [#allocation10]
            %s1622 = sphi %s2, %s2
          $region92: #{custom-call} parent=88 // loop_header_branch
            %1619 = sbr.rel (%p1617) target = $region96
          $region93: #{custom-call} parent=88 // loop_body
            %v1623 = vld [vmem:[%s1621] sm:$0x3]
            %1624 = vst [vmem:[%s1622] sm:$0x3] %v1623
          $region94: #{custom-call} parent=88 // loop_footer
            %s1620 = sadd.s32 1, %s1616
          $region95: #{custom-call} parent=88 // loop_footer_branch
            %1615 = sbr.rel target = $region91
          $region96: #{custom-call} parent=88 // loop_exit
            _
        $region89: #{custom-call} parent=73 // pred_fallthru
          _
      $region74: #{custom-call} parent=69 // pred_fallthru
        _
      // Predicated region
      $region75: #{custom-call} parent=69 // pred_check
        _
      $region76: #{custom-call} parent=69 // pred_check_branch
        %1600 = sbr.rel (0) target = $region78
      $region77: #{custom-call} parent=69 // pred_region
        loop: start=0, step=1, limit=1
        $region79: #{custom-call} parent=77 // loop_pre_header
          _
        $region80: #{custom-call} parent=77 // loop_header
          %s1603 = sphi 0, %s1607
          %p1604 = scmp.ge.s32.totalorder %s1603, 1
          %s1608 = sphi [#allocation10], [#allocation10]
          %s1609 = sphi %s2, %s2
        $region81: #{custom-call} parent=77 // loop_header_branch
          %1606 = sbr.rel (%p1604) target = $region85
        $region82: #{custom-call} parent=77 // loop_body
          %v1610 = vld [vmem:[%s1608] sm:$0x3]
          %1611 = vst [vmem:[%s1609] sm:$0x3] %v1610
        $region83: #{custom-call} parent=77 // loop_footer
          %s1607 = sadd.s32 1, %s1603
        $region84: #{custom-call} parent=77 // loop_footer_branch
          %1602 = sbr.rel target = $region80
        $region85: #{custom-call} parent=77 // loop_exit
          _
      $region78: #{custom-call} parent=69 // pred_fallthru
        _
    $region70: #{custom-call} parent=1 // pred_fallthru
      _
    %1625 = vnop

// kernel: fcos_postprocess.1
$region0: #{fcos_postprocess.1}
  #allocation0 [shape = 'u32[]', space=smem, size = 0x4, offset = 0x4, fixed_abs, tag = 'smem constant byte address 0x4 - core index']
  #allocation1 [shape = 'u32[144,128]{1,0:T(1,128)}', space=vmem, size = 0x12000, scoped, tag = 'internal scratch']
  %s0 = inlined_call_operand.vmem [shape: f32[2,3,1,128], index: 0, kind: input, shape index: {}]
  %s1 = inlined_call_operand.vmem [shape: f32[2,2,32,128], index: 1, kind: input, shape index: {}]
  %s2 = inlined_call_operand.vmem [shape: f32[2,6,32,128], index: 2, kind: input, shape index: {}]
  %s3 = inlined_call_operand.vmem [shape: f32[2,1,32,128], index: 3, kind: input, shape index: {}]
  %s4 = inlined_call_operand.vmem [shape: f32[3,32,128], index: 4, kind: input, shape index: {}]
  %s5 = inlined_call_operand.vmem [shape: bf16[2,1,32,128], index: 5, kind: input, shape index: {}]
  %s6 = inlined_call_operand.vmem [shape: f32[2,2,32,128], index: 6, kind: output, shape index: {0}]
  %s7 = inlined_call_operand.vmem [shape: f32[2,6,32,128], index: 7, kind: output, shape index: {1}]
  %8 = xla_tuple %s6, %s7
  %s9 = sld [smem:[#allocation0]]
  $region65: #{fcos_postprocess.1} parent=0
    _
  %s11 = ssub.s32 1, %s9
  %s12 = scalar_select 0, %s11, %s9
  loop: start=0, step=1, limit=4
  $region2: #{fcos_postprocess.1} parent=0 // loop_pre_header
    _
  $region3: #{fcos_postprocess.1} parent=0 // loop_header
    %s14 = sphi 0, %s18
    %p15 = scmp.ge.s32.totalorder %s14, 4
    %s21 = sphi 0, %s33
    %s22 = sphi 0, %s29
    %s23 = sphi 0, %s21
    %s24 = sphi 0, %s22
    %s25 = sphi 0, %s23
    %s26 = sphi 0, %s24
    %s36 = sphi 0, %s38
    %s39 = sphi 0, %s36
    %s40 = sphi 0, %s39
    %s56 = sphi 0, %s40
    %s64 = sphi 0, %s66
    %s67 = sphi 0, %s64
    %s68 = sphi 0, %s67
    %s84 = sphi 0, %s68
    %s92 = sphi 0, %s94
    %s95 = sphi 0, %s92
    %s96 = sphi 0, %s95
    %s112 = sphi 0, %s96
    %s120 = sphi 0, %s122
    %s123 = sphi 0, %s120
    %s124 = sphi 0, %s123
    %s140 = sphi 0, %s124
    %s146 = sphi 0, %s148
    %s149 = sphi 0, %s146
    %s150 = sphi 0, %s149
    %s166 = sphi 0, %s150
    %s174 = sphi 0, %s176
    %s177 = sphi 0, %s174
    %s178 = sphi 0, %s177
    %s194 = sphi 0, %s178
    %s202 = sphi 0, %s204
    %s205 = sphi 0, %s202
    %s206 = sphi 0, %s205
    %s222 = sphi 0, %s206
    %s230 = sphi 0, %s232
    %s233 = sphi 0, %s230
    %s234 = sphi 0, %s233
    %s250 = sphi 0, %s234
  $region4: #{fcos_postprocess.1} parent=0 // loop_header_branch
    %17 = sbr.rel (%p15) target = $region8
  $region5: #{fcos_postprocess.1} parent=0 // loop_body
    %s19 = ssub.s32 %s14, 1
    %s20 = ssub.s32 %s14, 2
    %s27 = sadd.s32 1, %s22
    %p28 = scmp.ge.s32.totalorder %s27, 1
    %s29 = scalar_select %p28, 0, %s27
    %s30 = sadd.s32 1, %s21
    %s31 = scalar_select %p28, %s30, %s21
    %p32 = scmp.ge.s32.totalorder %s31, 2
    %s33 = scalar_select %p32, 0, %s31
    %s34 = ssub.s32 %s21, %s33
    %p35 = scmp.eq.s32.totalorder %s34, 0
    %s37 = sadd.s32 %s36, 1
    %s38 = scalar_select %p35, %s36, %s37
    %p41 = pneg %p35
    %p42 = scmp.eq.s32.totalorder %s14, 1
    %p43 = por %p41, %p42
    %p44 = scmp.ne.s32.totalorder %s36, %s39
    %p45 = scmp.eq.s32.totalorder %s14, 0
    %p46 = por %p44, %p45
    %p47 = scmp.ne.s32.totalorder %s36, %s39
    %p48 = scmp.eq.s32.totalorder %s19, 1
    %p49 = por %p47, %p48
    %p50 = scmp.ne.s32.totalorder %s39, %s40
    %p51 = scmp.eq.s32.totalorder %s19, 0
    %p52 = por %p50, %p51
    %p53 = scmp.ne.s32.totalorder %s39, %s40
    %p54 = scmp.eq.s32.totalorder %s20, 1
    %p55 = por %p53, %p54
    %p57 = scmp.ne.s32.totalorder %s40, %s56
    %p58 = scmp.eq.s32.totalorder %s20, 0
    %p59 = por %p57, %p58
    %s60 = ssub.s32 %s21, %s33
    %s61 = ssub.s32 %s22, %s29
    %s62 = sor.u32 %s60, %s61
    %p63 = scmp.eq.s32.totalorder %s62, 0
    %s65 = sadd.s32 %s64, 1
    %s66 = scalar_select %p63, %s64, %s65
    %p69 = pneg %p63
    %p70 = scmp.eq.s32.totalorder %s14, 1
    %p71 = por %p69, %p70
    %p72 = scmp.ne.s32.totalorder %s64, %s67
    %p73 = scmp.eq.s32.totalorder %s14, 0
    %p74 = por %p72, %p73
    %p75 = scmp.ne.s32.totalorder %s64, %s67
    %p76 = scmp.eq.s32.totalorder %s19, 1
    %p77 = por %p75, %p76
    %p78 = scmp.ne.s32.totalorder %s67, %s68
    %p79 = scmp.eq.s32.totalorder %s19, 0
    %p80 = por %p78, %p79
    %p81 = scmp.ne.s32.totalorder %s67, %s68
    %p82 = scmp.eq.s32.totalorder %s20, 1
    %p83 = por %p81, %p82
    %p85 = scmp.ne.s32.totalorder %s68, %s84
    %p86 = scmp.eq.s32.totalorder %s20, 0
    %p87 = por %p85, %p86
    %s88 = ssub.s32 %s21, %s33
    %s89 = ssub.s32 %s22, %s29
    %s90 = sor.u32 %s88, %s89
    %p91 = scmp.eq.s32.totalorder %s90, 0
    %s93 = sadd.s32 %s92, 1
    %s94 = scalar_select %p91, %s92, %s93
    %p97 = pneg %p91
    %p98 = scmp.eq.s32.totalorder %s14, 1
    %p99 = por %p97, %p98
    %p100 = scmp.ne.s32.totalorder %s92, %s95
    %p101 = scmp.eq.s32.totalorder %s14, 0
    %p102 = por %p100, %p101
    %p103 = scmp.ne.s32.totalorder %s92, %s95
    %p104 = scmp.eq.s32.totalorder %s19, 1
    %p105 = por %p103, %p104
    %p106 = scmp.ne.s32.totalorder %s95, %s96
    %p107 = scmp.eq.s32.totalorder %s19, 0
    %p108 = por %p106, %p107
    %p109 = scmp.ne.s32.totalorder %s95, %s96
    %p110 = scmp.eq.s32.totalorder %s20, 1
    %p111 = por %p109, %p110
    %p113 = scmp.ne.s32.totalorder %s96, %s112
    %p114 = scmp.eq.s32.totalorder %s20, 0
    %p115 = por %p113, %p114
    %s116 = ssub.s32 %s21, %s33
    %s117 = ssub.s32 %s22, %s29
    %s118 = sor.u32 %s116, %s117
    %p119 = scmp.eq.s32.totalorder %s118, 0
    %s121 = sadd.s32 %s120, 1
    %s122 = scalar_select %p119, %s120, %s121
    %p125 = pneg %p119
    %p126 = scmp.eq.s32.totalorder %s14, 1
    %p127 = por %p125, %p126
    %p128 = scmp.ne.s32.totalorder %s120, %s123
    %p129 = scmp.eq.s32.totalorder %s14, 0
    %p130 = por %p128, %p129
    %p131 = scmp.ne.s32.totalorder %s120, %s123
    %p132 = scmp.eq.s32.totalorder %s19, 1
    %p133 = por %p131, %p132
    %p134 = scmp.ne.s32.totalorder %s123, %s124
    %p135 = scmp.eq.s32.totalorder %s19, 0
    %p136 = por %p134, %p135
    %p137 = scmp.ne.s32.totalorder %s123, %s124
    %p138 = scmp.eq.s32.totalorder %s20, 1
    %p139 = por %p137, %p138
    %p141 = scmp.ne.s32.totalorder %s124, %s140
    %p142 = scmp.eq.s32.totalorder %s20, 0
    %p143 = por %p141, %p142
    %s144 = ssub.s32 %s22, %s29
    %p145 = scmp.eq.s32.totalorder %s144, 0
    %s147 = sadd.s32 %s146, 1
    %s148 = scalar_select %p145, %s146, %s147
    %p151 = pneg %p145
    %p152 = scmp.eq.s32.totalorder %s14, 1
    %p153 = por %p151, %p152
    %p154 = scmp.ne.s32.totalorder %s146, %s149
    %p155 = scmp.eq.s32.totalorder %s14, 0
    %p156 = por %p154, %p155
    %p157 = scmp.ne.s32.totalorder %s146, %s149
    %p158 = scmp.eq.s32.totalorder %s19, 1
    %p159 = por %p157, %p158
    %p160 = scmp.ne.s32.totalorder %s149, %s150
    %p161 = scmp.eq.s32.totalorder %s19, 0
    %p162 = por %p160, %p161
    %p163 = scmp.ne.s32.totalorder %s149, %s150
    %p164 = scmp.eq.s32.totalorder %s20, 1
    %p165 = por %p163, %p164
    %p167 = scmp.ne.s32.totalorder %s150, %s166
    %p168 = scmp.eq.s32.totalorder %s20, 0
    %p169 = por %p167, %p168
    %s170 = ssub.s32 %s21, %s33
    %s171 = ssub.s32 %s22, %s29
    %s172 = sor.u32 %s170, %s171
    %p173 = scmp.eq.s32.totalorder %s172, 0
    %s175 = sadd.s32 %s174, 1
    %s176 = scalar_select %p173, %s174, %s175
    %p179 = pneg %p173
    %p180 = scmp.eq.s32.totalorder %s14, 1
    %p181 = por %p179, %p180
    %p182 = scmp.ne.s32.totalorder %s174, %s177
    %p183 = scmp.eq.s32.totalorder %s14, 0
    %p184 = por %p182, %p183
    %p185 = scmp.ne.s32.totalorder %s174, %s177
    %p186 = scmp.eq.s32.totalorder %s19, 1
    %p187 = por %p185, %p186
    %p188 = scmp.ne.s32.totalorder %s177, %s178
    %p189 = scmp.eq.s32.totalorder %s19, 0
    %p190 = por %p188, %p189
    %p191 = scmp.ne.s32.totalorder %s177, %s178
    %p192 = scmp.eq.s32.totalorder %s20, 1
    %p193 = por %p191, %p192
    %p195 = scmp.ne.s32.totalorder %s178, %s194
    %p196 = scmp.eq.s32.totalorder %s20, 0
    %p197 = por %p195, %p196
    %s198 = ssub.s32 %s21, %s33
    %s199 = ssub.s32 %s22, %s29
    %s200 = sor.u32 %s198, %s199
    %p201 = scmp.eq.s32.totalorder %s200, 0
    %s203 = sadd.s32 %s202, 1
    %s204 = scalar_select %p201, %s202, %s203
    %p207 = pneg %p201
    %p208 = scmp.eq.s32.totalorder %s14, 1
    %p209 = por %p207, %p208
    %p210 = scmp.ne.s32.totalorder %s202, %s205
    %p211 = scmp.eq.s32.totalorder %s14, 0
    %p212 = por %p210, %p211
    %p213 = scmp.ne.s32.totalorder %s202, %s205
    %p214 = scmp.eq.s32.totalorder %s19, 1
    %p215 = por %p213, %p214
    %p216 = scmp.ne.s32.totalorder %s205, %s206
    %p217 = scmp.eq.s32.totalorder %s19, 0
    %p218 = por %p216, %p217
    %p219 = scmp.ne.s32.totalorder %s205, %s206
    %p220 = scmp.eq.s32.totalorder %s20, 1
    %p221 = por %p219, %p220
    %p223 = scmp.ne.s32.totalorder %s206, %s222
    %p224 = scmp.eq.s32.totalorder %s20, 0
    %p225 = por %p223, %p224
    %s226 = ssub.s32 %s21, %s33
    %s227 = ssub.s32 %s22, %s29
    %s228 = sor.u32 %s226, %s227
    %p229 = scmp.eq.s32.totalorder %s228, 0
    %s231 = sadd.s32 %s230, 1
    %s232 = scalar_select %p229, %s230, %s231
    %p235 = pneg %p229
    %p236 = scmp.eq.s32.totalorder %s14, 1
    %p237 = por %p235, %p236
    %p238 = scmp.ne.s32.totalorder %s230, %s233
    %p239 = scmp.eq.s32.totalorder %s14, 0
    %p240 = por %p238, %p239
    %p241 = scmp.ne.s32.totalorder %s230, %s233
    %p242 = scmp.eq.s32.totalorder %s19, 1
    %p243 = por %p241, %p242
    %p244 = scmp.ne.s32.totalorder %s233, %s234
    %p245 = scmp.eq.s32.totalorder %s19, 0
    %p246 = por %p244, %p245
    %p247 = scmp.ne.s32.totalorder %s233, %s234
    %p248 = scmp.eq.s32.totalorder %s20, 1
    %p249 = por %p247, %p248
    %p251 = scmp.ne.s32.totalorder %s234, %s250
    %p252 = scmp.eq.s32.totalorder %s20, 0
    %p253 = por %p251, %p252
    %p254 = scmp.le.s32.totalorder 1, %s14
    %p255 = scmp.lt.s32.totalorder %s14, 3
    %p256 = pnand %p254, %p255
    %p257 = pneg %p256
    // Predicated region
    $region9: #{fcos_postprocess.1} parent=5 // pred_check
      _
    $region10: #{fcos_postprocess.1} parent=5 // pred_check_branch
      %259 = sbr.rel (%p256) target = $region12
    $region11: #{fcos_postprocess.1} parent=5 // pred_region
      %s260 = ssub.s32 %s14, 1
      // Predicated region
      $region13: #{fcos_postprocess.1} parent=11 // pred_check
        %p261 = pneg %p162
      $region14: #{fcos_postprocess.1} parent=11 // pred_check_branch
        %263 = sbr.rel (%p261) target = $region16
      $region15: #{fcos_postprocess.1} parent=11 // pred_region
        %s264 = smul.u32 4, %s24
        %p265 = scmp.lt.s32.totalorder %s264, 3
        %s266 = scalar_select %p265, %s264, 3
        %s267 = smul.addr %s266, 8
        %s268 = scalar_lea.vmem %s4, %s267
        %s269 = smul.u32 4, %s24
      $region16: #{fcos_postprocess.1} parent=11 // pred_fallthru
        _
    $region12: #{fcos_postprocess.1} parent=5 // pred_fallthru
      _
    %p270 = scmp.lt.s32.totalorder %s14, 2
    // Predicated region
    $region17: #{fcos_postprocess.1} parent=5 // pred_check
      %p271 = pneg %p270
    $region18: #{fcos_postprocess.1} parent=5 // pred_check_branch
      %273 = sbr.rel (%p271) target = $region20
    $region19: #{fcos_postprocess.1} parent=5 // pred_region
      // Predicated region
      $region21: #{fcos_postprocess.1} parent=19 // pred_check
        %p274 = pneg %p46
      $region22: #{fcos_postprocess.1} parent=19 // pred_check_branch
        %276 = sbr.rel (%p274) target = $region24
      $region23: #{fcos_postprocess.1} parent=19 // pred_region
        %p277 = scmp.lt.s32.totalorder %s21, 1
        %s278 = scalar_select %p277, %s21, 1
        %s279 = smul.addr %s278, 3
        %s280 = scalar_lea.vmem %s0, %s279
      $region24: #{fcos_postprocess.1} parent=19 // pred_fallthru
        _
      // Predicated region
      $region25: #{fcos_postprocess.1} parent=19 // pred_check
        %p281 = pneg %p74
      $region26: #{fcos_postprocess.1} parent=19 // pred_check_branch
        %283 = sbr.rel (%p281) target = $region28
      $region27: #{fcos_postprocess.1} parent=19 // pred_region
        %s284 = smul.u32 4, %s22
        %p285 = scmp.lt.s32.totalorder %s21, 1
        %s286 = scalar_select %p285, %s21, 1
        %p287 = scmp.lt.s32.totalorder %s284, 3
        %s288 = scalar_select %p287, %s284, 3
        %s289 = smul.addr %s286, 8
        %s290 = sadd.s32 %s288, %s289
        %s291 = smul.addr %s290, 8
        %s292 = scalar_lea.vmem %s1, %s291
        %s293 = smul.u32 4, %s22
      $region28: #{fcos_postprocess.1} parent=19 // pred_fallthru
        _
      // Predicated region
      $region29: #{fcos_postprocess.1} parent=19 // pred_check
        %p294 = pneg %p102
      $region30: #{fcos_postprocess.1} parent=19 // pred_check_branch
        %296 = sbr.rel (%p294) target = $region32
      $region31: #{fcos_postprocess.1} parent=19 // pred_region
        %s297 = smul.u32 4, %s22
        %p298 = scmp.lt.s32.totalorder %s21, 1
        %s299 = scalar_select %p298, %s21, 1
        %p300 = scmp.lt.s32.totalorder %s297, 3
        %s301 = scalar_select %p300, %s297, 3
        %s302 = smul.addr %s299, 24
        %s303 = sadd.s32 %s301, %s302
        %s304 = smul.addr %s303, 8
        %s305 = scalar_lea.vmem %s2, %s304
        %s306 = smul.u32 4, %s22
      $region32: #{fcos_postprocess.1} parent=19 // pred_fallthru
        _
      // Predicated region
      $region33: #{fcos_postprocess.1} parent=19 // pred_check
        %p307 = pneg %p130
      $region34: #{fcos_postprocess.1} parent=19 // pred_check_branch
        %309 = sbr.rel (%p307) target = $region36
      $region35: #{fcos_postprocess.1} parent=19 // pred_region
        %s310 = smul.u32 4, %s22
        %p311 = scmp.lt.s32.totalorder %s21, 1
        %s312 = scalar_select %p311, %s21, 1
        %p313 = scmp.lt.s32.totalorder %s310, 3
        %s314 = scalar_select %p313, %s310, 3
        %s315 = smul.addr %s312, 4
        %s316 = sadd.s32 %s314, %s315
        %s317 = smul.addr %s316, 8
        %s318 = scalar_lea.vmem %s3, %s317
        %s319 = smul.u32 4, %s22
      $region36: #{fcos_postprocess.1} parent=19 // pred_fallthru
        _
      // Predicated region
      $region37: #{fcos_postprocess.1} parent=19 // pred_check
        %p320 = pneg %p184
      $region38: #{fcos_postprocess.1} parent=19 // pred_check_branch
        %322 = sbr.rel (%p320) target = $region40
      $region39: #{fcos_postprocess.1} parent=19 // pred_region
        %s323 = smul.u32 4, %s22
        %p324 = scmp.lt.s32.totalorder %s21, 1
        %s325 = scalar_select %p324, %s21, 1
        %p326 = scmp.lt.s32.totalorder %s323, 3
        %s327 = scalar_select %p326, %s323, 3
        %s328 = smul.addr %s325, 4
        %s329 = sadd.s32 %s327, %s328
        %s330 = smul.addr %s329, 4
        %s331 = scalar_lea.vmem %s5, %s330
        %s332 = smul.u32 4, %s22
      $region40: #{fcos_postprocess.1} parent=19 // pred_fallthru
        _
    $region20: #{fcos_postprocess.1} parent=5 // pred_fallthru
      _
    %p333 = scmp.le.s32.totalorder 1, %s14
    %p334 = scmp.lt.s32.totalorder %s14, 3
    %p335 = pnand %p333, %p334
    %p336 = pneg %p335
    // Predicated region
    $region41: #{fcos_postprocess.1} parent=5 // pred_check
      _
    $region42: #{fcos_postprocess.1} parent=5 // pred_check_branch
      %338 = sbr.rel (%p335) target = $region44
    $region43: #{fcos_postprocess.1} parent=5 // pred_region
      %s339 = ssub.s32 %s14, 1
      %p340 = scmp.lt.s32.totalorder %s23, 1
      %s341 = scalar_select %p340, %s23, 1
      %s342 = smul.addr %s341, 3
      %s343 = scalar_lea.vmem %s0, %s342
      %p344 = pneg %p52
      %p345 = pneg %p49
      %s346 = smul.u32 4, %s24
      %p347 = scmp.lt.s32.totalorder %s23, 1
      %s348 = scalar_select %p347, %s23, 1
      %p349 = scmp.lt.s32.totalorder %s346, 3
      %s350 = scalar_select %p349, %s346, 3
      %s351 = smul.addr %s348, 8
      %s352 = sadd.s32 %s350, %s351
      %s353 = smul.addr %s352, 8
      %s354 = scalar_lea.vmem %s1, %s353
      %p355 = pneg %p80
      %p356 = pneg %p77
      %s357 = smul.u32 4, %s24
      %p358 = scmp.lt.s32.totalorder %s23, 1
      %s359 = scalar_select %p358, %s23, 1
      %p360 = scmp.lt.s32.totalorder %s357, 3
      %s361 = scalar_select %p360, %s357, 3
      %s362 = smul.addr %s359, 24
      %s363 = sadd.s32 %s361, %s362
      %s364 = smul.addr %s363, 8
      %s365 = scalar_lea.vmem %s2, %s364
      %p366 = pneg %p108
      %p367 = pneg %p105
      %s368 = smul.u32 4, %s24
      %p369 = scmp.lt.s32.totalorder %s23, 1
      %s370 = scalar_select %p369, %s23, 1
      %p371 = scmp.lt.s32.totalorder %s368, 3
      %s372 = scalar_select %p371, %s368, 3
      %s373 = smul.addr %s370, 4
      %s374 = sadd.s32 %s372, %s373
      %s375 = smul.addr %s374, 8
      %s376 = scalar_lea.vmem %s3, %s375
      %p377 = pneg %p136
      %p378 = pneg %p133
      %s379 = smul.u32 4, %s24
      %p380 = scmp.lt.s32.totalorder %s379, 3
      %s381 = scalar_select %p380, %s379, 3
      %s382 = smul.addr %s381, 8
      %s383 = scalar_lea.vmem %s4, %s382
      %p384 = pneg %p162
      %p385 = pneg %p159
      %s386 = smul.u32 4, %s24
      %p387 = scmp.lt.s32.totalorder %s23, 1
      %s388 = scalar_select %p387, %s23, 1
      %p389 = scmp.lt.s32.totalorder %s386, 3
      %s390 = scalar_select %p389, %s386, 3
      %s391 = smul.addr %s388, 4
      %s392 = sadd.s32 %s390, %s391
      %s393 = smul.addr %s392, 4
      %s394 = scalar_lea.vmem %s5, %s393
      %p395 = pneg %p190
      %p396 = pneg %p187
      %p397 = pneg %p218
      %p398 = pneg %p215
      %s399 = smul.u32 4, %s24
      %p400 = scmp.lt.s32.totalorder %s23, 1
      %s401 = scalar_select %p400, %s23, 1
      %p402 = scmp.lt.s32.totalorder %s399, 3
      %s403 = scalar_select %p402, %s399, 3
      %s404 = smul.addr %s401, 8
      %s405 = sadd.s32 %s403, %s404
      %s406 = smul.addr %s405, 8
      %s407 = scalar_lea.vmem %s6, %s406
      %p408 = pneg %p246
      %p409 = pneg %p243
      %s410 = smul.u32 4, %s24
      %p411 = scmp.lt.s32.totalorder %s23, 1
      %s412 = scalar_select %p411, %s23, 1
      %p413 = scmp.lt.s32.totalorder %s410, 3
      %s414 = scalar_select %p413, %s410, 3
      %s415 = smul.addr %s412, 24
      %s416 = sadd.s32 %s414, %s415
      %s417 = smul.addr %s416, 8
      %s418 = scalar_lea.vmem %s7, %s417
      %p419 = scmp.lt.s32.totalorder %s23, 1
      %s420 = scalar_select %p419, %s23, 1
      %s421 = smul.addr %s420, 3
      %s422 = scalar_lea.vmem %s0, %s421
      %s423 = smul.u32 4, %s24
      %p424 = scmp.lt.s32.totalorder %s23, 1
      %s425 = scalar_select %p424, %s23, 1
      %p426 = scmp.lt.s32.totalorder %s423, 3
      %s427 = scalar_select %p426, %s423, 3
      %s428 = smul.addr %s425, 8
      %s429 = sadd.s32 %s427, %s428
      %s430 = smul.addr %s429, 8
      %s431 = scalar_lea.vmem %s1, %s430
      %s432 = smul.u32 4, %s24
      %s433 = smul.u32 4, %s24
      %p434 = scmp.lt.s32.totalorder %s23, 1
      %s435 = scalar_select %p434, %s23, 1
      %p436 = scmp.lt.s32.totalorder %s433, 3
      %s437 = scalar_select %p436, %s433, 3
      %s438 = smul.addr %s435, 24
      %s439 = sadd.s32 %s437, %s438
      %s440 = smul.addr %s439, 8
      %s441 = scalar_lea.vmem %s2, %s440
      %s442 = smul.u32 4, %s24
      %s443 = smul.u32 4, %s24
      %p444 = scmp.lt.s32.totalorder %s23, 1
      %s445 = scalar_select %p444, %s23, 1
      %p446 = scmp.lt.s32.totalorder %s443, 3
      %s447 = scalar_select %p446, %s443, 3
      %s448 = smul.addr %s445, 4
      %s449 = sadd.s32 %s447, %s448
      %s450 = smul.addr %s449, 8
      %s451 = scalar_lea.vmem %s3, %s450
      %s452 = smul.u32 4, %s24
      %s453 = smul.u32 4, %s24
      %p454 = scmp.lt.s32.totalorder %s453, 3
      %s455 = scalar_select %p454, %s453, 3
      %s456 = smul.addr %s455, 8
      %s457 = scalar_lea.vmem %s4, %s456
      %s458 = smul.u32 4, %s24
      %s459 = smul.u32 4, %s24
      %p460 = scmp.lt.s32.totalorder %s23, 1
      %s461 = scalar_select %p460, %s23, 1
      %p462 = scmp.lt.s32.totalorder %s459, 3
      %s463 = scalar_select %p462, %s459, 3
      %s464 = smul.addr %s461, 4
      %s465 = sadd.s32 %s463, %s464
      %s466 = smul.addr %s465, 4
      %s467 = scalar_lea.vmem %s5, %s466
      %s468 = smul.u32 4, %s24
      %s469 = smul.u32 4, %s24
      %p470 = scmp.lt.s32.totalorder %s23, 1
      %s471 = scalar_select %p470, %s23, 1
      %p472 = scmp.lt.s32.totalorder %s469, 3
      %s473 = scalar_select %p472, %s469, 3
      %s474 = smul.addr %s471, 8
      %s475 = sadd.s32 %s473, %s474
      %s476 = smul.addr %s475, 8
      %s477 = scalar_lea.vmem %s6, %s476
      %s478 = smul.u32 4, %s24
      %s479 = smul.u32 4, %s24
      %p480 = scmp.lt.s32.totalorder %s23, 1
      %s481 = scalar_select %p480, %s23, 1
      %p482 = scmp.lt.s32.totalorder %s479, 3
      %s483 = scalar_select %p482, %s479, 3
      %s484 = smul.addr %s481, 24
      %s485 = sadd.s32 %s483, %s484
      %s486 = smul.addr %s485, 8
      %s487 = scalar_lea.vmem %s7, %s486
      %s488 = smul.u32 4, %s24
      %v489 = vld [vmem:[%s431] sm:$0xff]
      %v490 = vld [vmem:[%s431 + $0x8] sm:$0xff]
      %v491 = vld [vmem:[%s431 + $0x10] sm:$0xff]
      %v492 = vld [vmem:[%s431 + $0x18] sm:$0xff]
      %v493 = vld [vmem:[%s431 + $0x20] sm:$0xff]
      %v494 = vld [vmem:[%s431 + $0x28] sm:$0xff]
      %v495 = vld [vmem:[%s431 + $0x30] sm:$0xff]
      %v496 = vld [vmem:[%s431 + $0x38] sm:$0xff]
      %v497 = vxor.u32 %v489, 2147483648
      %v498 = vxor.u32 %v490, 2147483648
      %v499 = vxor.u32 %v491, 2147483648
      %v500 = vxor.u32 %v492, 2147483648
      %v501 = vxor.u32 %v493, 2147483648
      %v502 = vxor.u32 %v494, 2147483648
      %v503 = vxor.u32 %v495, 2147483648
      %v504 = vxor.u32 %v496, 2147483648
      %v505 = vmul.f32 %v497, 1.442695
      %v506 = vpow.pop %v505
      %v507 = vmul.f32 %v498, 1.442695
      %v508 = vpow.pop %v507
      %v509 = vmul.f32 %v499, 1.442695
      %v510 = vpow.pop %v509
      %v511 = vmul.f32 %v500, 1.442695
      %v512 = vpow.pop %v511
      %v513 = vmul.f32 %v501, 1.442695
      %v514 = vpow.pop %v513
      %v515 = vmul.f32 %v502, 1.442695
      %v516 = vpow.pop %v515
      %v517 = vmul.f32 %v503, 1.442695
      %v518 = vpow.pop %v517
      %v519 = vmul.f32 %v504, 1.442695
      %v520 = vpow.pop %v519
      %v521 = vadd.f32 %v506, 1.0
      %v522 = vadd.f32 %v508, 1.0
      %v523 = vadd.f32 %v510, 1.0
      %v524 = vadd.f32 %v512, 1.0
      %v525 = vadd.f32 %v514, 1.0
      %v526 = vadd.f32 %v516, 1.0
      %v527 = vadd.f32 %v518, 1.0
      %v528 = vadd.f32 %v520, 1.0
      %v529 = vrcp.pop %v521
      %v530 = vmul.f32 1.0, %v529
      %v531 = vrcp.pop %v522
      %v532 = vmul.f32 1.0, %v531
      %v533 = vrcp.pop %v523
      %v534 = vmul.f32 1.0, %v533
      %v535 = vrcp.pop %v524
      %v536 = vmul.f32 1.0, %v535
      %v537 = vrcp.pop %v525
      %v538 = vmul.f32 1.0, %v537
      %v539 = vrcp.pop %v526
      %v540 = vmul.f32 1.0, %v539
      %v541 = vrcp.pop %v527
      %v542 = vmul.f32 1.0, %v541
      %v543 = vrcp.pop %v528
      %v544 = vmul.f32 1.0, %v543
      %v545 = vld [vmem:[%s451] sm:$0xff]
      %v546 = vld [vmem:[%s451 + $0x8] sm:$0xff]
      %v547 = vld [vmem:[%s451 + $0x10] sm:$0xff]
      %v548 = vld [vmem:[%s451 + $0x18] sm:$0xff]
      %v549 = vxor.u32 %v545, 2147483648
      %v550 = vxor.u32 %v546, 2147483648
      %v551 = vxor.u32 %v547, 2147483648
      %v552 = vxor.u32 %v548, 2147483648
      %v553 = vmul.f32 %v549, 1.442695
      %v554 = vpow.pop %v553
      %v555 = vmul.f32 %v550, 1.442695
      %v556 = vpow.pop %v555
      %v557 = vmul.f32 %v551, 1.442695
      %v558 = vpow.pop %v557
      %v559 = vmul.f32 %v552, 1.442695
      %v560 = vpow.pop %v559
      %v561 = vadd.f32 %v554, 1.0
      %v562 = vadd.f32 %v556, 1.0
      %v563 = vadd.f32 %v558, 1.0
      %v564 = vadd.f32 %v560, 1.0
      %v565 = vrcp.pop %v561
      %v566 = vmul.f32 1.0, %v565
      %v567 = vrcp.pop %v562
      %v568 = vmul.f32 1.0, %v567
      %v569 = vrcp.pop %v563
      %v570 = vmul.f32 1.0, %v569
      %v571 = vrcp.pop %v564
      %v572 = vmul.f32 1.0, %v571
      %v573 = vld [vmem:[%s467] sm:$0xf]
      %v574 = vld [vmem:[%s467 + $0x4] sm:$0xf]
      %v575 = vld [vmem:[%s467 + $0x8] sm:$0xf]
      %v576 = vld [vmem:[%s467 + $0xc] sm:$0xf]
      %v577 = vunpack.c.l.bf16 %v573
      %v578 = vunpack.c.l.bf16 %v574
      %v579 = vunpack.c.l.bf16 %v575
      %v580 = vunpack.c.l.bf16 %v576
      %vm581 = vcmp.gt.f32.partialorder %v577, 0.5
      %vm582 = vcmp.gt.f32.partialorder %v578, 0.5
      %vm583 = vcmp.gt.f32.partialorder %v579, 0.5
      %vm584 = vcmp.gt.f32.partialorder %v580, 0.5
      %vm585 = vcmp.gt.f32.partialorder %v530, 0.3
      %vm586 = vcmp.gt.f32.partialorder %v532, 0.3
      %vm587 = vcmp.gt.f32.partialorder %v534, 0.3
      %vm588 = vcmp.gt.f32.partialorder %v536, 0.3
      %vm589 = vcmp.gt.f32.partialorder %v538, 0.3
      %vm590 = vcmp.gt.f32.partialorder %v540, 0.3
      %vm591 = vcmp.gt.f32.partialorder %v542, 0.3
      %vm592 = vcmp.gt.f32.partialorder %v544, 0.3
      %v593 = vsel %vm581, 1, 0
      %v594 = vsel %vm582, 1, 0
      %v595 = vsel %vm583, 1, 0
      %v596 = vsel %vm584, 1, 0
      %vm597 = vcmp.eq.s32.totalorder %v593, 1
      %vm598 = vcmp.eq.s32.totalorder %v594, 1
      %vm599 = vcmp.eq.s32.totalorder %v595, 1
      %vm600 = vcmp.eq.s32.totalorder %v596, 1
      %vm601 = vmand %vm585, %vm597
      %vm602 = vmand %vm586, %vm598
      %vm603 = vmand %vm587, %vm599
      %vm604 = vmand %vm588, %vm600
      %vm605 = vmand %vm589, %vm597
      %vm606 = vmand %vm590, %vm598
      %vm607 = vmand %vm591, %vm599
      %vm608 = vmand %vm592, %vm600
      %v609 = vmul.f32 %v530, %v566
      %v610 = vmul.f32 %v532, %v568
      %v611 = vmul.f32 %v534, %v570
      %v612 = vmul.f32 %v536, %v572
      %v613 = vmul.f32 %v538, %v566
      %v614 = vmul.f32 %v540, %v568
      %v615 = vmul.f32 %v542, %v570
      %v616 = vmul.f32 %v544, %v572
      %v617 = vsel %vm601, %v609, -inf
      %v618 = vsel %vm602, %v610, -inf
      %v619 = vsel %vm603, %v611, -inf
      %v620 = vsel %vm604, %v612, -inf
      %v621 = vsel %vm605, %v613, -inf
      %v622 = vsel %vm606, %v614, -inf
      %v623 = vsel %vm607, %v615, -inf
      %v624 = vsel %vm608, %v616, -inf
      %625 = vst [vmem:[%s477] sm:$0xff] %v617
      %626 = vst [vmem:[%s477 + $0x8] sm:$0xff] %v618
      %627 = vst [vmem:[%s477 + $0x10] sm:$0xff] %v619
      %628 = vst [vmem:[%s477 + $0x18] sm:$0xff] %v620
      %629 = vst [vmem:[%s477 + $0x20] sm:$0xff] %v621
      %630 = vst [vmem:[%s477 + $0x28] sm:$0xff] %v622
      %631 = vst [vmem:[%s477 + $0x30] sm:$0xff] %v623
      %632 = vst [vmem:[%s477 + $0x38] sm:$0xff] %v624
      %v633 = vld [vmem:[%s457] sm:$0xff]
      %v634 = vld [vmem:[%s457 + $0x8] sm:$0xff]
      %v635 = vld [vmem:[%s457 + $0x10] sm:$0xff]
      %v636 = vld [vmem:[%s457 + $0x18] sm:$0xff]
      %v637 = vld [vmem:[%s457 + $0x20] sm:$0xff]
      %v638 = vld [vmem:[%s457 + $0x28] sm:$0xff]
      %v639 = vld [vmem:[%s457 + $0x30] sm:$0xff]
      %v640 = vld [vmem:[%s457 + $0x38] sm:$0xff]
      %v641 = vld [vmem:[%s457 + $0x40] sm:$0xff]
      %v642 = vld [vmem:[%s457 + $0x48] sm:$0xff]
      %v643 = vld [vmem:[%s457 + $0x50] sm:$0xff]
      %v644 = vld [vmem:[%s457 + $0x58] sm:$0xff]
      %v645 = vld [vmem:[%s441] sm:$0xff]
      %v646 = vld [vmem:[%s441 + $0x8] sm:$0xff]
      %v647 = vld [vmem:[%s441 + $0x10] sm:$0xff]
      %v648 = vld [vmem:[%s441 + $0x18] sm:$0xff]
      %v649 = vld [vmem:[%s441 + $0x20] sm:$0xff]
      %v650 = vld [vmem:[%s441 + $0x28] sm:$0xff]
      %v651 = vld [vmem:[%s441 + $0x30] sm:$0xff]
      %v652 = vld [vmem:[%s441 + $0x38] sm:$0xff]
      %v653 = vld [vmem:[%s441 + $0x40] sm:$0xff]
      %v654 = vld [vmem:[%s441 + $0x48] sm:$0xff]
      %v655 = vld [vmem:[%s441 + $0x50] sm:$0xff]
      %v656 = vld [vmem:[%s441 + $0x58] sm:$0xff]
      %v657 = vld [vmem:[%s441 + $0x60] sm:$0xff]
      %v658 = vld [vmem:[%s441 + $0x68] sm:$0xff]
      %v659 = vld [vmem:[%s441 + $0x70] sm:$0xff]
      %v660 = vld [vmem:[%s441 + $0x78] sm:$0xff]
      %v661 = vld [vmem:[%s441 + $0x80] sm:$0xff]
      %v662 = vld [vmem:[%s441 + $0x88] sm:$0xff]
      %v663 = vld [vmem:[%s441 + $0x90] sm:$0xff]
      %v664 = vld [vmem:[%s441 + $0x98] sm:$0xff]
      %v665 = vld [vmem:[%s441 + $0xa0] sm:$0xff]
      %v666 = vld [vmem:[%s441 + $0xa8] sm:$0xff]
      %v667 = vld [vmem:[%s441 + $0xb0] sm:$0xff]
      %v668 = vld [vmem:[%s441 + $0xb8] sm:$0xff]
      %v669 = vld [vmem:[%s422] sm:$0x1]
      %v670 = vld [vmem:[%s422 + $0x1] sm:$0x1]
      %v671 = vld [vmem:[%s422 + $0x2] sm:$0x1]
      %v672 = vsub.f32 %v633, %v645
      %v673 = vsub.f32 %v634, %v646
      %v674 = vsub.f32 %v635, %v647
      %v675 = vsub.f32 %v636, %v648
      %v676 = vsub.f32 %v637, %v649
      %v677 = vsub.f32 %v638, %v650
      %v678 = vsub.f32 %v639, %v651
      %v679 = vsub.f32 %v640, %v652
      %v680 = vsub.f32 %v641, %v653
      %v681 = vsub.f32 %v642, %v654
      %v682 = vsub.f32 %v643, %v655
      %v683 = vsub.f32 %v644, %v656
      %v684 = vmax.f32 %v672, 0.0
      %v685 = vmax.f32 %v673, 0.0
      %v686 = vmax.f32 %v674, 0.0
      %v687 = vmax.f32 %v675, 0.0
      %v688 = vmax.f32 %v676, 0.0
      %v689 = vmax.f32 %v677, 0.0
      %v690 = vmax.f32 %v678, 0.0
      %v691 = vmax.f32 %v679, 0.0
      %v692 = vmax.f32 %v680, 0.0
      %v693 = vmax.f32 %v681, 0.0
      %v694 = vmax.f32 %v682, 0.0
      %v695 = vmax.f32 %v683, 0.0
      %v699 = vlaneseq
      %v700 = vshrl.u32 %v699, 7
      %v701 = vsub.s32 0, %v700
      %v702 = vrot.slane %v669, %v701
      %v703 = vlaneseq
      %v704 = vshrl.u32 %v703, 7
      %v705 = vsub.s32 0, %v704
      %v706 = vrot.slane %v670, %v705
      %v707 = vlaneseq
      %v708 = vshrl.u32 %v707, 7
      %v709 = vsub.s32 0, %v708
      %v710 = vrot.slane %v671, %v709
      %v714 = vmin.f32 %v684, %v702
      %v715 = vmin.f32 %v685, %v702
      %v716 = vmin.f32 %v686, %v702
      %v717 = vmin.f32 %v687, %v702
      %v718 = vmin.f32 %v688, %v706
      %v719 = vmin.f32 %v689, %v706
      %v720 = vmin.f32 %v690, %v706
      %v721 = vmin.f32 %v691, %v706
      %v722 = vmin.f32 %v692, %v710
      %v723 = vmin.f32 %v693, %v710
      %v724 = vmin.f32 %v694, %v710
      %v725 = vmin.f32 %v695, %v710
      %v726 = vadd.f32 %v633, %v657
      %v727 = vadd.f32 %v634, %v658
      %v728 = vadd.f32 %v635, %v659
      %v729 = vadd.f32 %v636, %v660
      %v730 = vadd.f32 %v637, %v661
      %v731 = vadd.f32 %v638, %v662
      %v732 = vadd.f32 %v639, %v663
      %v733 = vadd.f32 %v640, %v664
      %v734 = vadd.f32 %v641, %v665
      %v735 = vadd.f32 %v642, %v666
      %v736 = vadd.f32 %v643, %v667
      %v737 = vadd.f32 %v644, %v668
      %v738 = vmax.f32 %v726, 0.0
      %v739 = vmax.f32 %v727, 0.0
      %v740 = vmax.f32 %v728, 0.0
      %v741 = vmax.f32 %v729, 0.0
      %v742 = vmax.f32 %v730, 0.0
      %v743 = vmax.f32 %v731, 0.0
      %v744 = vmax.f32 %v732, 0.0
      %v745 = vmax.f32 %v733, 0.0
      %v746 = vmax.f32 %v734, 0.0
      %v747 = vmax.f32 %v735, 0.0
      %v748 = vmax.f32 %v736, 0.0
      %v749 = vmax.f32 %v737, 0.0
      %v750 = vmin.f32 %v738, %v702
      %v751 = vmin.f32 %v739, %v702
      %v752 = vmin.f32 %v740, %v702
      %v753 = vmin.f32 %v741, %v702
      %v754 = vmin.f32 %v742, %v706
      %v755 = vmin.f32 %v743, %v706
      %v756 = vmin.f32 %v744, %v706
      %v757 = vmin.f32 %v745, %v706
      %v758 = vmin.f32 %v746, %v710
      %v759 = vmin.f32 %v747, %v710
      %v760 = vmin.f32 %v748, %v710
      %v761 = vmin.f32 %v749, %v710
      %762 = vst [vmem:[%s487] sm:$0xff] %v714
      %763 = vst [vmem:[%s487 + $0x8] sm:$0xff] %v715
      %764 = vst [vmem:[%s487 + $0x10] sm:$0xff] %v716
      %765 = vst [vmem:[%s487 + $0x18] sm:$0xff] %v717
      %766 = vst [vmem:[%s487 + $0x20] sm:$0xff] %v718
      %767 = vst [vmem:[%s487 + $0x28] sm:$0xff] %v719
      %768 = vst [vmem:[%s487 + $0x30] sm:$0xff] %v720
      %769 = vst [vmem:[%s487 + $0x38] sm:$0xff] %v721
      %770 = vst [vmem:[%s487 + $0x40] sm:$0xff] %v722
      %771 = vst [vmem:[%s487 + $0x48] sm:$0xff] %v723
      %772 = vst [vmem:[%s487 + $0x50] sm:$0xff] %v724
      %773 = vst [vmem:[%s487 + $0x58] sm:$0xff] %v725
      %s774 = scalar_lea.vmem %s487, 96
      %775 = vst [vmem:[%s774] sm:$0xff] %v750
      %776 = vst [vmem:[%s774 + $0x8] sm:$0xff] %v751
      %777 = vst [vmem:[%s774 + $0x10] sm:$0xff] %v752
      %778 = vst [vmem:[%s774 + $0x18] sm:$0xff] %v753
      %779 = vst [vmem:[%s774 + $0x20] sm:$0xff] %v754
      %780 = vst [vmem:[%s774 + $0x28] sm:$0xff] %v755
      %781 = vst [vmem:[%s774 + $0x30] sm:$0xff] %v756
      %782 = vst [vmem:[%s774 + $0x38] sm:$0xff] %v757
      %783 = vst [vmem:[%s774 + $0x40] sm:$0xff] %v758
      %784 = vst [vmem:[%s774 + $0x48] sm:$0xff] %v759
      %785 = vst [vmem:[%s774 + $0x50] sm:$0xff] %v760
      %786 = vst [vmem:[%s774 + $0x58] sm:$0xff] %v761
      %s787 = smul.u32 4, %s24
      %p788 = scmp.lt.s32.totalorder %s23, 1
      %s789 = scalar_select %p788, %s23, 1
      %p790 = scmp.lt.s32.totalorder %s787, 3
      %s791 = scalar_select %p790, %s787, 3
      %s792 = smul.addr %s789, 8
      %s793 = sadd.s32 %s791, %s792
      %s794 = smul.addr %s793, 8
      %s795 = scalar_lea.vmem %s6, %s794
      %s796 = smul.u32 4, %s24
      %p797 = scmp.lt.s32.totalorder %s23, 1
      %s798 = scalar_select %p797, %s23, 1
      %p799 = scmp.lt.s32.totalorder %s796, 3
      %s800 = scalar_select %p799, %s796, 3
      %s801 = smul.addr %s798, 24
      %s802 = sadd.s32 %s800, %s801
      %s803 = smul.addr %s802, 8
      %s804 = scalar_lea.vmem %s7, %s803
      // Predicated region
      $region45: #{fcos_postprocess.1} parent=43 // pred_check
        %p805 = pneg %p215
      $region46: #{fcos_postprocess.1} parent=43 // pred_check_branch
        %807 = sbr.rel (%p805) target = $region48
      $region47: #{fcos_postprocess.1} parent=43 // pred_region
        %s808 = smul.u32 4, %s24
      $region48: #{fcos_postprocess.1} parent=43 // pred_fallthru
        _
      // Predicated region
      $region49: #{fcos_postprocess.1} parent=43 // pred_check
        %p809 = pneg %p243
      $region50: #{fcos_postprocess.1} parent=43 // pred_check_branch
        %811 = sbr.rel (%p809) target = $region52
      $region51: #{fcos_postprocess.1} parent=43 // pred_region
        %s812 = smul.u32 4, %s24
      $region52: #{fcos_postprocess.1} parent=43 // pred_fallthru
        _
    $region44: #{fcos_postprocess.1} parent=5 // pred_fallthru
      _
    %p813 = scmp.le.s32.totalorder 2, %s14
    // Predicated region
    $region53: #{fcos_postprocess.1} parent=5 // pred_check
      %p814 = pneg %p813
    $region54: #{fcos_postprocess.1} parent=5 // pred_check_branch
      %816 = sbr.rel (%p814) target = $region56
    $region55: #{fcos_postprocess.1} parent=5 // pred_region
      %s817 = ssub.s32 %s14, 2
      // Predicated region
      $region57: #{fcos_postprocess.1} parent=55 // pred_check
        %p818 = pneg %p221
      $region58: #{fcos_postprocess.1} parent=55 // pred_check_branch
        %820 = sbr.rel (%p818) target = $region60
      $region59: #{fcos_postprocess.1} parent=55 // pred_region
        %s821 = smul.u32 4, %s26
        %p822 = scmp.lt.s32.totalorder %s25, 1
        %s823 = scalar_select %p822, %s25, 1
        %p824 = scmp.lt.s32.totalorder %s821, 3
        %s825 = scalar_select %p824, %s821, 3
        %s826 = smul.addr %s823, 8
        %s827 = sadd.s32 %s825, %s826
        %s828 = smul.addr %s827, 8
        %s829 = scalar_lea.vmem %s6, %s828
      $region60: #{fcos_postprocess.1} parent=55 // pred_fallthru
        _
      // Predicated region
      $region61: #{fcos_postprocess.1} parent=55 // pred_check
        %p830 = pneg %p249
      $region62: #{fcos_postprocess.1} parent=55 // pred_check_branch
        %832 = sbr.rel (%p830) target = $region64
      $region63: #{fcos_postprocess.1} parent=55 // pred_region
        %s833 = smul.u32 4, %s26
        %p834 = scmp.lt.s32.totalorder %s25, 1
        %s835 = scalar_select %p834, %s25, 1
        %p836 = scmp.lt.s32.totalorder %s833, 3
        %s837 = scalar_select %p836, %s833, 3
        %s838 = smul.addr %s835, 24
        %s839 = sadd.s32 %s837, %s838
        %s840 = smul.addr %s839, 8
        %s841 = scalar_lea.vmem %s7, %s840
      $region64: #{fcos_postprocess.1} parent=55 // pred_fallthru
        _
    $region56: #{fcos_postprocess.1} parent=5 // pred_fallthru
      _
  $region6: #{fcos_postprocess.1} parent=0 // loop_footer
    %s18 = sadd.s32 1, %s14
  $region7: #{fcos_postprocess.1} parent=0 // loop_footer_branch
    %13 = sbr.rel target = $region3
  $region8: #{fcos_postprocess.1} parent=0 // loop_exit
    _

</llo_original>
